<compile_context>
chip_gen: v5e
topology: v5e:2x2
jax: 0.10.0
libtpu: 0.0.40
codegen_flags: <defaults>
</compile_context>

<pallas_src>
import functools

import jax
import jax.numpy as jnp
from jax import lax
from jax.experimental import pallas as pl
from jax.experimental.pallas import tpu as pltpu

_EPS = 1e-5


def _round_up(a, b):
    return (a + b - 1) // b * b


# --------------------------------------------------------------------------- #
# In-kernel helpers
# --------------------------------------------------------------------------- #
def _bn_train(h, gamma, beta):
    # PyTorch BatchNorm1d, training mode, affine=True (biased variance),
    # two-pass statistics for numerical robustness.
    m = jnp.mean(h, axis=0, keepdims=True)
    d = h - m
    var = jnp.mean(d * d, axis=0, keepdims=True)
    return d * lax.rsqrt(var + _EPS) * gamma + beta


def _bn_train_noaffine(h):
    m = jnp.mean(h, axis=0, keepdims=True)
    d = h - m
    var = jnp.mean(d * d, axis=0, keepdims=True)
    return d * lax.rsqrt(var + _EPS)


# --------------------------------------------------------------------------- #
# Kernel
# --------------------------------------------------------------------------- #
def _simsiam_kernel(cstem, dim, pred_dim, n, inv_hw, wacc, tcol,
                    x3_ref, colid_ref, wconv_ref, wpack_ref,
                    out_ref, stack_ref):
    f32 = jnp.float32

    # ---- im2col built ONCE: 3 host row(di)-shifted copies + 2 static lane
    #      (dj) shifts, stored into a VMEM scratch at packed-aligned rows ----
    x3 = x3_ref[...]                                   # (rblk, LE) bf16
    rblk = x3.shape[0]
    stack_ref[0:rblk, :] = x3[:, 0:wacc]               # dj = 0
    stack_ref[rblk:2 * rblk, :] = x3[:, 1:1 + wacc]    # dj = 1
    stack_ref[2 * rblk:3 * rblk, :] = x3[:, 2:2 + wacc]  # dj = 2
    wconv = wconv_ref[...]                             # (cstem, 3*rblk) bf16

    nrow = lax.broadcasted_iota(jnp.int32, (n, tcol), 0)

    # ---- conv stem (single fused-K bf16 MXU matmul per tile) + ReLU +
    #      streamed masked global-average pool into an (N, cstem) accumulator ----
    feat = jnp.zeros((n, cstem), f32)
    for j in range(wacc // tcol):
        cs = j * tcol
        tile = stack_ref[:, cs:cs + tcol]              # (3*rblk, tcol) bf16, aligned
        conv_t = jnp.maximum(
            jnp.dot(wconv, tile, preferred_element_type=f32), 0.0)  # (cstem, tcol)
        pool_t = jnp.where(colid_ref[:, cs:cs + tcol] == nrow,
                           jnp.float32(inv_hw), jnp.float32(0.0))   # (n, tcol)
        feat = feat + lax.dot_general(
            pool_t, conv_t, (((1,), (1,)), ((), ())),
            preferred_element_type=f32)

    # ---- unpack the single packed parameter slab ----
    wpack = wpack_ref[...]                             # (cstem+dim+8, 128) f32
    w1 = wpack[0:cstem, 0:cstem]
    w2 = wpack[0:cstem, cstem:2 * cstem]
    w3 = wpack[0:cstem, 2 * cstem:2 * cstem + dim]
    wp1 = wpack[cstem:cstem + dim, 0:pred_dim]         # (dim, pred_dim)
    wp2t = wpack[cstem:cstem + dim, pred_dim:2 * pred_dim]  # wp2^T (dim, pred_dim)
    v = cstem + dim
    g1 = wpack[v + 0:v + 1, 0:cstem]
    b1 = wpack[v + 1:v + 2, 0:cstem]
    g2 = wpack[v + 2:v + 3, 0:cstem]
    b2 = wpack[v + 3:v + 4, 0:cstem]
    b3 = wpack[v + 4:v + 5, 0:dim]
    gp = wpack[v + 5:v + 6, 0:pred_dim]
    bp = wpack[v + 6:v + 7, 0:pred_dim]
    bp2 = wpack[v + 7:v + 8, 0:dim]

    # ---- projection MLP head (args.mlp=True replacement of encoder.fc) ----
    h1 = jnp.maximum(
        _bn_train(jnp.dot(feat, w1, preferred_element_type=f32), g1, b1), 0.0)
    h2 = jnp.maximum(
        _bn_train(jnp.dot(h1, w2, preferred_element_type=f32), g2, b2), 0.0)
    z = _bn_train_noaffine(jnp.dot(h2, w3, preferred_element_type=f32) + b3)

    # ---- predictor MLP (wp2 stored transposed -> contract last dims) ----
    ph = jnp.maximum(
        _bn_train(jnp.dot(z, wp1, preferred_element_type=f32), gp, bp), 0.0)
    p = lax.dot_general(ph, wp2t, (((1,), (1,)), ((), ())),
                        preferred_element_type=f32) + bp2

    # Single lane-dense (N, 2*dim) store, split in the wrapper.
    out_ref[...] = jnp.concatenate([p, z], axis=-1)


# --------------------------------------------------------------------------- #
# Host-side layout plumbing + wrapper
# --------------------------------------------------------------------------- #
def _prepare_operands(x, params):
    f32, bf16 = jnp.float32, jnp.bfloat16
    N, C, H, W = x.shape
    cstem = params["wconv"].shape[0]
    dim = params["w3"].shape[1]
    pred_dim = params["wp1"].shape[1]
    Hp, Wp = H + 2, W + 2
    L = N * Hp * Wp
    max_valid = (N - 1) * Hp * Wp + (H - 1) * Wp + (W - 1)

    # Column-tile size and (tile-divisible) number of conv output columns.
    tcol = 512
    wacc = _round_up(max_valid + 1, 128)
    if wacc >= tcol:
        wacc = _round_up(wacc, tcol)
    else:
        tcol = wacc
    le = _round_up(wacc + 2, 128)          # +2 for the in-kernel dj lane shifts
    rblk = _round_up(3 * (C + 1), 16)      # bf16 sublane-tile aligned row block

    # Padded image + all-ones bias channel, channel-major, flattened; the host
    # ships three row(di)-shifted bf16 copies stacked along sublanes.
    xpad = jnp.pad(x.astype(f32), ((0, 0), (0, 0), (1, 1), (1, 1)))
    xaug = jnp.concatenate([xpad, jnp.ones((N, 1, Hp, Wp), f32)], axis=1)
    xflat = jnp.transpose(xaug, (1, 0, 2, 3)).reshape(C + 1, L)
    total = max(L, 2 * Wp + le)
    xflat = jnp.pad(xflat, ((0, 0), (0, total - L)))
    x3 = jnp.concatenate([xflat[:, di * Wp: di * Wp + le] for di in range(3)],
                         axis=0)
    x3 = jnp.pad(x3, ((0, rblk - 3 * (C + 1)), (0, 0))).astype(bf16)

    # Conv weights as one lane-dense (cstem, 3*rblk) bf16 slab: column
    # dj*rblk + di*(C+1) + c; conv bias folded into the (dj=0,di=0) ones col.
    wcols = jnp.zeros((cstem, 3 * rblk), f32)
    for dj in range(3):
        for di in range(3):
            base = dj * rblk + di * (C + 1)
            wcols = wcols.at[:, base:base + C].set(params["wconv"][:, :, di, dj])
    wcols = wcols.at[:, C].set(params["bc"])
    wconv = wcols.astype(bf16)

    # Per-column sample id (-1 = padding / invalid). The pool mask is built
    # in-kernel from this 10 KB vector instead of shipping an 80 KB matrix.
    r = jnp.arange(wacc)
    n_idx = r // (Hp * Wp)
    a = (r // Wp) % Hp
    b = r % Wp
    valid = (n_idx < N) & (a < H) & (b < W)
    colid = jnp.where(valid, n_idx, -1).astype(jnp.int32).reshape(1, wacc)

    # Every dense f32 parameter in a single lane-dense (cstem+dim+8, 128) slab.
    assert 2 * cstem + dim <= 128 and 2 * pred_dim <= 128 and dim <= 128
    wmlp = jnp.concatenate([params["w1"], params["w2"], params["w3"]], axis=1)
    wmlp = jnp.pad(wmlp, ((0, 0), (0, 128 - wmlp.shape[1])))
    wpk = jnp.concatenate([params["wp1"], params["wp2"].T], axis=1)
    wpk = jnp.pad(wpk, ((0, 0), (0, 128 - wpk.shape[1])))

    def _row(v):
        return jnp.pad(v.reshape(1, -1).astype(f32), ((0, 0), (0, 128 - v.size)))

    vecs = jnp.concatenate(
        [_row(params[k]) for k in ("g1", "b1", "g2", "b2", "b3", "gp", "bp", "bp2")],
        axis=0)
    wpack = jnp.concatenate([wmlp, wpk, vecs], axis=0).astype(f32)

    return x3, colid, wconv, wpack, (H, W, cstem, dim, pred_dim, wacc, tcol, rblk)


def simsiam_forward(x, params):
    """Returns (p, z) = Model_with_Predictor(x) via one fused Pallas kernel."""
    x3, colid, wconv, wpack, meta = _prepare_operands(x, params)
    H, W, cstem, dim, pred_dim, wacc, tcol, rblk = meta
    N = x.shape[0]
    k3 = wconv.shape[1]

    kernel = functools.partial(_simsiam_kernel, cstem, dim, pred_dim, N,
                               1.0 / (H * W), wacc, tcol)
    flops = int(2 * cstem * k3 * wacc                       # fused conv stem
                + 2 * N * cstem * wacc                      # streamed pool
                + 2 * N * (2 * cstem * cstem + cstem * dim + 2 * dim * pred_dim))
    bytes_accessed = int(sum(int(a.size) * a.dtype.itemsize
                             for a in (x3, colid, wconv, wpack))
                         + N * 2 * dim * 4)
    vmem = pl.BlockSpec(memory_space=pltpu.MemorySpace.VMEM)

    out = pl.pallas_call(
        kernel,
        out_shape=jax.ShapeDtypeStruct((N, 2 * dim), jnp.float32),
        in_specs=[vmem] * 4,
        out_specs=vmem,
        scratch_shapes=[pltpu.VMEM((3 * rblk, wacc), jnp.bfloat16)],
        cost_estimate=pl.CostEstimate(
            flops=flops,
            transcendentals=int(2 * cstem + dim + pred_dim),
            bytes_accessed=bytes_accessed),
    )(x3, colid, wconv, wpack)
    return out[:, :dim], out[:, dim:]


# --------------------------------------------------------------------------- #
# Synthetic parameters + pure-JAX reference
# --------------------------------------------------------------------------- #
def init_params(key, c_in, c_stem, dim, pred_dim):
    ks = jax.random.split(key, 6)
    s = 0.05
    f32 = jnp.float32
    return dict(
        # conv stem standing in for the abstract base_encoder backbone
        wconv=jax.random.normal(ks[0], (c_stem, c_in, 3, 3), f32) * s,
        bc=jnp.zeros((c_stem,), f32),
        # projection head (args.mlp=True): Linear/BN/ReLU x2 + fc + BN(affine=False)
        w1=jax.random.normal(ks[1], (c_stem, c_stem), f32) * s,
        g1=jnp.ones((c_stem,), f32), b1=jnp.zeros((c_stem,), f32),
        w2=jax.random.normal(ks[2], (c_stem, c_stem), f32) * s,
        g2=jnp.ones((c_stem,), f32), b2=jnp.zeros((c_stem,), f32),
        w3=jax.random.normal(ks[3], (c_stem, dim), f32) * s,
        b3=jnp.zeros((dim,), f32),
        # predictor: Linear(dim,pred_dim,no bias) -> BN -> ReLU -> Linear(pred_dim,dim)
        wp1=jax.random.normal(ks[4], (dim, pred_dim), f32) * s,
        gp=jnp.ones((pred_dim,), f32), bp=jnp.zeros((pred_dim,), f32),
        wp2=jax.random.normal(ks[5], (pred_dim, dim), f32) * s,
        bp2=jnp.zeros((dim,), f32),
    )


def reference_forward(x, params):
    """Pure-JAX reference (conv operands cast to bf16 to mirror the MXU path)."""
    f32, bf16 = jnp.float32, jnp.bfloat16
    N, C, H, W = x.shape
    wconv = params["wconv"].astype(bf16).astype(f32)
    bc = params["bc"].astype(bf16).astype(f32)
    xr = x.astype(bf16).astype(f32)
    xp = jnp.pad(xr, ((0, 0), (0, 0), (1, 1), (1, 1)))
    conv = jnp.zeros((N, wconv.shape[0], H, W), f32)
    for di in range(3):
        for dj in range(3):
            conv = conv + jnp.einsum("nchw,oc->nohw",
                                     xp[:, :, di:di + H, dj:dj + W],
                                     wconv[:, :, di, dj])
    conv = jax.nn.relu(conv + bc[None, :, None, None])
    feat = conv.mean(axis=(2, 3))

    def bn(h, g, b):
        return (h - h.mean(0, keepdims=True)) * lax.rsqrt(h.var(0, keepdims=True) + _EPS) * g + b

    def bn0(h):
        return (h - h.mean(0, keepdims=True)) * lax.rsqrt(h.var(0, keepdims=True) + _EPS)

    h1 = jax.nn.relu(bn(feat @ params["w1"], params["g1"], params["b1"]))
    h2 = jax.nn.relu(bn(h1 @ params["w2"], params["g2"], params["b2"]))
    z = bn0(h2 @ params["w3"] + params["b3"])
    ph = jax.nn.relu(bn(z @ params["wp1"], params["gp"], params["bp"]))
    p = ph @ params["wp2"] + params["bp2"]
    return p, z


if __name__ == "__main__":
    # batch=8, channels=3, spatial=16x16, prev_dim=32, dim=64, pred_dim=16
    N, C, H, W = 8, 3, 16, 16
    PREV_DIM, DIM, PRED_DIM = 32, 64, 16

    key = jax.random.PRNGKey(0)
    kx, kp = jax.random.split(key)
    x = jax.random.normal(kx, (N, C, H, W), jnp.float32)      # NCHW like PyTorch
    params = init_params(kp, c_in=C, c_stem=PREV_DIM, dim=DIM, pred_dim=PRED_DIM)

    fwd = jax.jit(simsiam_forward)
    p, z = fwd(x, params)
    jax.block_until_ready((p, z))

    assert p.shape == (N, DIM) and z.shape == (N, DIM)
    assert bool(jnp.all(jnp.isfinite(p))) and bool(jnp.all(jnp.isfinite(z)))

    p_ref, z_ref = reference_forward(x, params)
    assert jnp.allclose(p, p_ref, atol=3e-2, rtol=3e-2), \
        f"p mismatch, max abs err {float(jnp.max(jnp.abs(p - p_ref)))}"
    assert jnp.allclose(z, z_ref, atol=3e-2, rtol=3e-2), \
        f"z mismatch, max abs err {float(jnp.max(jnp.abs(z - z_ref)))}"
    print("KERNEL_OK")
</pallas_src>

<mosaic_0001>
module attributes {stable_mosaic.version = 11 : i64} {
  func.func @_simsiam_kernel(%arg0: memref<16x2688xbf16, #tpu.memory_space<vmem>>, %arg1: memref<1x2560xi32, #tpu.memory_space<vmem>>, %arg2: memref<32x48xbf16, #tpu.memory_space<vmem>>, %arg3: memref<104x128xf32, #tpu.memory_space<vmem>>, %arg4: memref<8x128xf32, #tpu.memory_space<vmem>>, %arg5: memref<48x2560xbf16, #tpu.memory_space<vmem>>) attributes {dimension_semantics = [], scalar_prefetch = 0 : i64, scratch_operands = 1 : i64, tpu.core_type = #tpu.core_type<tc>} {
    %c0 = arith.constant 0 : index
    %c0_0 = arith.constant 0 : index
    %0 = vector.load %arg0[%c0, %c0_0] : memref<16x2688xbf16, #tpu.memory_space<vmem>>, vector<16x2688xbf16>
    %1 = vector.extract_strided_slice %0 {offsets = [0, 0], sizes = [16, 2560], strides = [1, 1]} : vector<16x2688xbf16> to vector<16x2560xbf16>
    %c0_1 = arith.constant 0 : index
    %c0_2 = arith.constant 0 : index
    %2 = vector.load %arg5[%c0_1, %c0_2] : memref<48x2560xbf16, #tpu.memory_space<vmem>>, vector<16x2560xbf16>
    tpu.vector_store %arg5[%c0_1, %c0_2], %1 {strides = array<i32>} : memref<48x2560xbf16, #tpu.memory_space<vmem>>, vector<16x2560xbf16>,
    %3 = vector.extract_strided_slice %0 {offsets = [0, 1], sizes = [16, 2560], strides = [1, 1]} : vector<16x2688xbf16> to vector<16x2560xbf16>
    %c16 = arith.constant 16 : index
    %c0_3 = arith.constant 0 : index
    %4 = vector.load %arg5[%c16, %c0_3] : memref<48x2560xbf16, #tpu.memory_space<vmem>>, vector<16x2560xbf16>
    tpu.vector_store %arg5[%c16, %c0_3], %3 {strides = array<i32>} : memref<48x2560xbf16, #tpu.memory_space<vmem>>, vector<16x2560xbf16>,
    %5 = vector.extract_strided_slice %0 {offsets = [0, 2], sizes = [16, 2560], strides = [1, 1]} : vector<16x2688xbf16> to vector<16x2560xbf16>
    %c32 = arith.constant 32 : index
    %c0_4 = arith.constant 0 : index
    %6 = vector.load %arg5[%c32, %c0_4] : memref<48x2560xbf16, #tpu.memory_space<vmem>>, vector<16x2560xbf16>
    tpu.vector_store %arg5[%c32, %c0_4], %5 {strides = array<i32>} : memref<48x2560xbf16, #tpu.memory_space<vmem>>, vector<16x2560xbf16>,
    %c0_5 = arith.constant 0 : index
    %c0_6 = arith.constant 0 : index
    %7 = vector.load %arg2[%c0_5, %c0_6] : memref<32x48xbf16, #tpu.memory_space<vmem>>, vector<32x48xbf16>
    %8 = tpu.iota {dimensions = array<i32: 0>} : vector<8x512xi32>
    %cst = arith.constant 0.000000e+00 : f32
    %9 = vector.broadcast %cst : f32 to vector<8x32xf32>
    %c0_7 = arith.constant 0 : index
    %c0_8 = arith.constant 0 : index
    %10 = vector.load %arg5[%c0_7, %c0_8] : memref<48x2560xbf16, #tpu.memory_space<vmem>>, vector<48x512xbf16>
    %cst_9 = arith.constant dense<0.000000e+00> : vector<32x512xf32>
    %11 = tpu.matmul %7, %10, %cst_9 {dimension_numbers = #tpu.dot_dimension_numbers<[1], [0], [0], [1], [0, 0, 1, 1], [], []>} : vector<32x48xbf16>, vector<48x512xbf16>, vector<32x512xf32> -> vector<32x512xf32>
    %cst_10 = arith.constant 0.000000e+00 : f32
    %12 = vector.broadcast %cst_10 : f32 to vector<32x512xf32>
    %13 = arith.maximumf %11, %12 : vector<32x512xf32>
    %c0_11 = arith.constant 0 : index
    %c0_12 = arith.constant 0 : index
    %14 = vector.load %arg1[%c0_11, %c0_12] : memref<1x2560xi32, #tpu.memory_space<vmem>>, vector<1x512xi32>
    %15 = vector.broadcast %14 : vector<1x512xi32> to vector<8x512xi32>
    %16 = arith.cmpi eq, %15, %8 : vector<8x512xi32>
    %cst_13 = arith.constant 3.906250e-03 : f32
    %cst_14 = arith.constant 0.000000e+00 : f32
    %17 = vector.broadcast %cst_13 : f32 to vector<8x512xf32>
    %18 = vector.broadcast %cst_14 : f32 to vector<8x512xf32>
    %19 = arith.select %16, %17, %18 : vector<8x512xi1>, vector<8x512xf32>
    %cst_15 = arith.constant dense<0.000000e+00> : vector<8x32xf32>
    %20 = tpu.matmul %19, %13, %cst_15 {dimension_numbers = #tpu.dot_dimension_numbers<[1], [1], [0], [0], [0, 0, 1, 0], [], []>} : vector<8x512xf32>, vector<32x512xf32>, vector<8x32xf32> -> vector<8x32xf32>
    %21 = arith.addf %9, %20 : vector<8x32xf32>
    %c0_16 = arith.constant 0 : index
    %c512 = arith.constant 512 : index
    %22 = vector.load %arg5[%c0_16, %c512] : memref<48x2560xbf16, #tpu.memory_space<vmem>>, vector<48x512xbf16>
    %cst_17 = arith.constant dense<0.000000e+00> : vector<32x512xf32>
    %23 = tpu.matmul %7, %22, %cst_17 {dimension_numbers = #tpu.dot_dimension_numbers<[1], [0], [0], [1], [0, 0, 1, 1], [], []>} : vector<32x48xbf16>, vector<48x512xbf16>, vector<32x512xf32> -> vector<32x512xf32>
    %cst_18 = arith.constant 0.000000e+00 : f32
    %24 = vector.broadcast %cst_18 : f32 to vector<32x512xf32>
    %25 = arith.maximumf %23, %24 : vector<32x512xf32>
    %c0_19 = arith.constant 0 : index
    %c512_20 = arith.constant 512 : index
    %26 = vector.load %arg1[%c0_19, %c512_20] : memref<1x2560xi32, #tpu.memory_space<vmem>>, vector<1x512xi32>
    %27 = vector.broadcast %26 : vector<1x512xi32> to vector<8x512xi32>
    %28 = arith.cmpi eq, %27, %8 : vector<8x512xi32>
    %cst_21 = arith.constant 3.906250e-03 : f32
    %cst_22 = arith.constant 0.000000e+00 : f32
    %29 = vector.broadcast %cst_21 : f32 to vector<8x512xf32>
    %30 = vector.broadcast %cst_22 : f32 to vector<8x512xf32>
    %31 = arith.select %28, %29, %30 : vector<8x512xi1>, vector<8x512xf32>
    %cst_23 = arith.constant dense<0.000000e+00> : vector<8x32xf32>
    %32 = tpu.matmul %31, %25, %cst_23 {dimension_numbers = #tpu.dot_dimension_numbers<[1], [1], [0], [0], [0, 0, 1, 0], [], []>} : vector<8x512xf32>, vector<32x512xf32>, vector<8x32xf32> -> vector<8x32xf32>
    %33 = arith.addf %21, %32 : vector<8x32xf32>
    %c0_24 = arith.constant 0 : index
    %c1024 = arith.constant 1024 : index
    %34 = vector.load %arg5[%c0_24, %c1024] : memref<48x2560xbf16, #tpu.memory_space<vmem>>, vector<48x512xbf16>
    %cst_25 = arith.constant dense<0.000000e+00> : vector<32x512xf32>
    %35 = tpu.matmul %7, %34, %cst_25 {dimension_numbers = #tpu.dot_dimension_numbers<[1], [0], [0], [1], [0, 0, 1, 1], [], []>} : vector<32x48xbf16>, vector<48x512xbf16>, vector<32x512xf32> -> vector<32x512xf32>
    %cst_26 = arith.constant 0.000000e+00 : f32
    %36 = vector.broadcast %cst_26 : f32 to vector<32x512xf32>
    %37 = arith.maximumf %35, %36 : vector<32x512xf32>
    %c0_27 = arith.constant 0 : index
    %c1024_28 = arith.constant 1024 : index
    %38 = vector.load %arg1[%c0_27, %c1024_28] : memref<1x2560xi32, #tpu.memory_space<vmem>>, vector<1x512xi32>
    %39 = vector.broadcast %38 : vector<1x512xi32> to vector<8x512xi32>
    %40 = arith.cmpi eq, %39, %8 : vector<8x512xi32>
    %cst_29 = arith.constant 3.906250e-03 : f32
    %cst_30 = arith.constant 0.000000e+00 : f32
    %41 = vector.broadcast %cst_29 : f32 to vector<8x512xf32>
    %42 = vector.broadcast %cst_30 : f32 to vector<8x512xf32>
    %43 = arith.select %40, %41, %42 : vector<8x512xi1>, vector<8x512xf32>
    %cst_31 = arith.constant dense<0.000000e+00> : vector<8x32xf32>
    %44 = tpu.matmul %43, %37, %cst_31 {dimension_numbers = #tpu.dot_dimension_numbers<[1], [1], [0], [0], [0, 0, 1, 0], [], []>} : vector<8x512xf32>, vector<32x512xf32>, vector<8x32xf32> -> vector<8x32xf32>
    %45 = arith.addf %33, %44 : vector<8x32xf32>
    %c0_32 = arith.constant 0 : index
    %c1536 = arith.constant 1536 : index
    %46 = vector.load %arg5[%c0_32, %c1536] : memref<48x2560xbf16, #tpu.memory_space<vmem>>, vector<48x512xbf16>
    %cst_33 = arith.constant dense<0.000000e+00> : vector<32x512xf32>
    %47 = tpu.matmul %7, %46, %cst_33 {dimension_numbers = #tpu.dot_dimension_numbers<[1], [0], [0], [1], [0, 0, 1, 1], [], []>} : vector<32x48xbf16>, vector<48x512xbf16>, vector<32x512xf32> -> vector<32x512xf32>
    %cst_34 = arith.constant 0.000000e+00 : f32
    %48 = vector.broadcast %cst_34 : f32 to vector<32x512xf32>
    %49 = arith.maximumf %47, %48 : vector<32x512xf32>
    %c0_35 = arith.constant 0 : index
    %c1536_36 = arith.constant 1536 : index
    %50 = vector.load %arg1[%c0_35, %c1536_36] : memref<1x2560xi32, #tpu.memory_space<vmem>>, vector<1x512xi32>
    %51 = vector.broadcast %50 : vector<1x512xi32> to vector<8x512xi32>
    %52 = arith.cmpi eq, %51, %8 : vector<8x512xi32>
    %cst_37 = arith.constant 3.906250e-03 : f32
    %cst_38 = arith.constant 0.000000e+00 : f32
    %53 = vector.broadcast %cst_37 : f32 to vector<8x512xf32>
    %54 = vector.broadcast %cst_38 : f32 to vector<8x512xf32>
    %55 = arith.select %52, %53, %54 : vector<8x512xi1>, vector<8x512xf32>
    %cst_39 = arith.constant dense<0.000000e+00> : vector<8x32xf32>
    %56 = tpu.matmul %55, %49, %cst_39 {dimension_numbers = #tpu.dot_dimension_numbers<[1], [1], [0], [0], [0, 0, 1, 0], [], []>} : vector<8x512xf32>, vector<32x512xf32>, vector<8x32xf32> -> vector<8x32xf32>
    %57 = arith.addf %45, %56 : vector<8x32xf32>
    %c0_40 = arith.constant 0 : index
    %c2048 = arith.constant 2048 : index
    %58 = vector.load %arg5[%c0_40, %c2048] : memref<48x2560xbf16, #tpu.memory_space<vmem>>, vector<48x512xbf16>
    %cst_41 = arith.constant dense<0.000000e+00> : vector<32x512xf32>
    %59 = tpu.matmul %7, %58, %cst_41 {dimension_numbers = #tpu.dot_dimension_numbers<[1], [0], [0], [1], [0, 0, 1, 1], [], []>} : vector<32x48xbf16>, vector<48x512xbf16>, vector<32x512xf32> -> vector<32x512xf32>
    %cst_42 = arith.constant 0.000000e+00 : f32
    %60 = vector.broadcast %cst_42 : f32 to vector<32x512xf32>
    %61 = arith.maximumf %59, %60 : vector<32x512xf32>
    %c0_43 = arith.constant 0 : index
    %c2048_44 = arith.constant 2048 : index
    %62 = vector.load %arg1[%c0_43, %c2048_44] : memref<1x2560xi32, #tpu.memory_space<vmem>>, vector<1x512xi32>
    %63 = vector.broadcast %62 : vector<1x512xi32> to vector<8x512xi32>
    %64 = arith.cmpi eq, %63, %8 : vector<8x512xi32>
    %cst_45 = arith.constant 3.906250e-03 : f32
    %cst_46 = arith.constant 0.000000e+00 : f32
    %65 = vector.broadcast %cst_45 : f32 to vector<8x512xf32>
    %66 = vector.broadcast %cst_46 : f32 to vector<8x512xf32>
    %67 = arith.select %64, %65, %66 : vector<8x512xi1>, vector<8x512xf32>
    %cst_47 = arith.constant dense<0.000000e+00> : vector<8x32xf32>
    %68 = tpu.matmul %67, %61, %cst_47 {dimension_numbers = #tpu.dot_dimension_numbers<[1], [1], [0], [0], [0, 0, 1, 0], [], []>} : vector<8x512xf32>, vector<32x512xf32>, vector<8x32xf32> -> vector<8x32xf32>
    %69 = arith.addf %57, %68 : vector<8x32xf32>
    %c0_48 = arith.constant 0 : index
    %c0_49 = arith.constant 0 : index
    %70 = vector.load %arg3[%c0_48, %c0_49] : memref<104x128xf32, #tpu.memory_space<vmem>>, vector<104x128xf32>
    %71 = vector.extract_strided_slice %70 {offsets = [0, 0], sizes = [32, 32], strides = [1, 1]} : vector<104x128xf32> to vector<32x32xf32>
    %72 = vector.extract_strided_slice %70 {offsets = [0, 32], sizes = [32, 32], strides = [1, 1]} : vector<104x128xf32> to vector<32x32xf32>
    %73 = vector.extract_strided_slice %70 {offsets = [0, 64], sizes = [32, 64], strides = [1, 1]} : vector<104x128xf32> to vector<32x64xf32>
    %74 = vector.extract_strided_slice %70 {offsets = [32, 0], sizes = [64, 16], strides = [1, 1]} : vector<104x128xf32> to vector<64x16xf32>
    %75 = vector.extract_strided_slice %70 {offsets = [32, 16], sizes = [64, 16], strides = [1, 1]} : vector<104x128xf32> to vector<64x16xf32>
    %76 = vector.extract_strided_slice %70 {offsets = [96, 0], sizes = [1, 32], strides = [1, 1]} : vector<104x128xf32> to vector<1x32xf32>
    %77 = vector.extract_strided_slice %70 {offsets = [97, 0], sizes = [1, 32], strides = [1, 1]} : vector<104x128xf32> to vector<1x32xf32>
    %78 = vector.extract_strided_slice %70 {offsets = [98, 0], sizes = [1, 32], strides = [1, 1]} : vector<104x128xf32> to vector<1x32xf32>
    %79 = vector.extract_strided_slice %70 {offsets = [99, 0], sizes = [1, 32], strides = [1, 1]} : vector<104x128xf32> to vector<1x32xf32>
    %80 = vector.extract_strided_slice %70 {offsets = [100, 0], sizes = [1, 64], strides = [1, 1]} : vector<104x128xf32> to vector<1x64xf32>
    %81 = vector.extract_strided_slice %70 {offsets = [101, 0], sizes = [1, 16], strides = [1, 1]} : vector<104x128xf32> to vector<1x16xf32>
    %82 = vector.extract_strided_slice %70 {offsets = [102, 0], sizes = [1, 16], strides = [1, 1]} : vector<104x128xf32> to vector<1x16xf32>
    %83 = vector.extract_strided_slice %70 {offsets = [103, 0], sizes = [1, 64], strides = [1, 1]} : vector<104x128xf32> to vector<1x64xf32>
    %cst_50 = arith.constant dense<0.000000e+00> : vector<8x32xf32>
    %84 = tpu.matmul %69, %71, %cst_50 {dimension_numbers = #tpu.dot_dimension_numbers<[1], [0], [0], [1], [0, 0, 1, 1], [], []>} : vector<8x32xf32>, vector<32x32xf32>, vector<8x32xf32> -> vector<8x32xf32>
    %cst_51 = arith.constant dense<0.000000e+00> : vector<32xf32>
    %85 = vector.multi_reduction <add>, %84, %cst_51 [0] : vector<8x32xf32> to vector<32xf32>
    %86 = vector.shape_cast %85 : vector<32xf32> to vector<1x32xf32>
    %cst_52 = arith.constant 8.000000e+00 : f32
    %87 = vector.broadcast %cst_52 : f32 to vector<1x32xf32>
    %88 = arith.divf %86, %87 : vector<1x32xf32>
    %89 = vector.broadcast %88 : vector<1x32xf32> to vector<8x32xf32>
    %90 = arith.subf %84, %89 : vector<8x32xf32>
    %91 = arith.mulf %90, %90 : vector<8x32xf32>
    %cst_53 = arith.constant dense<0.000000e+00> : vector<32xf32>
    %92 = vector.multi_reduction <add>, %91, %cst_53 [0] : vector<8x32xf32> to vector<32xf32>
    %93 = vector.shape_cast %92 : vector<32xf32> to vector<1x32xf32>
    %cst_54 = arith.constant 8.000000e+00 : f32
    %94 = vector.broadcast %cst_54 : f32 to vector<1x32xf32>
    %95 = arith.divf %93, %94 : vector<1x32xf32>
    %cst_55 = arith.constant 9.99999974E-6 : f32
    %96 = vector.broadcast %cst_55 : f32 to vector<1x32xf32>
    %97 = arith.addf %95, %96 : vector<1x32xf32>
    %98 = math.rsqrt %97 : vector<1x32xf32>
    %99 = vector.broadcast %98 : vector<1x32xf32> to vector<8x32xf32>
    %100 = arith.mulf %90, %99 : vector<8x32xf32>
    %101 = vector.broadcast %76 : vector<1x32xf32> to vector<8x32xf32>
    %102 = arith.mulf %100, %101 : vector<8x32xf32>
    %103 = vector.broadcast %77 : vector<1x32xf32> to vector<8x32xf32>
    %104 = arith.addf %102, %103 : vector<8x32xf32>
    %cst_56 = arith.constant 0.000000e+00 : f32
    %105 = vector.broadcast %cst_56 : f32 to vector<8x32xf32>
    %106 = arith.maximumf %104, %105 : vector<8x32xf32>
    %cst_57 = arith.constant dense<0.000000e+00> : vector<8x32xf32>
    %107 = tpu.matmul %106, %72, %cst_57 {dimension_numbers = #tpu.dot_dimension_numbers<[1], [0], [0], [1], [0, 0, 1, 1], [], []>} : vector<8x32xf32>, vector<32x32xf32>, vector<8x32xf32> -> vector<8x32xf32>
    %cst_58 = arith.constant dense<0.000000e+00> : vector<32xf32>
    %108 = vector.multi_reduction <add>, %107, %cst_58 [0] : vector<8x32xf32> to vector<32xf32>
    %109 = vector.shape_cast %108 : vector<32xf32> to vector<1x32xf32>
    %cst_59 = arith.constant 8.000000e+00 : f32
    %110 = vector.broadcast %cst_59 : f32 to vector<1x32xf32>
    %111 = arith.divf %109, %110 : vector<1x32xf32>
    %112 = vector.broadcast %111 : vector<1x32xf32> to vector<8x32xf32>
    %113 = arith.subf %107, %112 : vector<8x32xf32>
    %114 = arith.mulf %113, %113 : vector<8x32xf32>
    %cst_60 = arith.constant dense<0.000000e+00> : vector<32xf32>
    %115 = vector.multi_reduction <add>, %114, %cst_60 [0] : vector<8x32xf32> to vector<32xf32>
    %116 = vector.shape_cast %115 : vector<32xf32> to vector<1x32xf32>
    %cst_61 = arith.constant 8.000000e+00 : f32
    %117 = vector.broadcast %cst_61 : f32 to vector<1x32xf32>
    %118 = arith.divf %116, %117 : vector<1x32xf32>
    %cst_62 = arith.constant 9.99999974E-6 : f32
    %119 = vector.broadcast %cst_62 : f32 to vector<1x32xf32>
    %120 = arith.addf %118, %119 : vector<1x32xf32>
    %121 = math.rsqrt %120 : vector<1x32xf32>
    %122 = vector.broadcast %121 : vector<1x32xf32> to vector<8x32xf32>
    %123 = arith.mulf %113, %122 : vector<8x32xf32>
    %124 = vector.broadcast %78 : vector<1x32xf32> to vector<8x32xf32>
    %125 = arith.mulf %123, %124 : vector<8x32xf32>
    %126 = vector.broadcast %79 : vector<1x32xf32> to vector<8x32xf32>
    %127 = arith.addf %125, %126 : vector<8x32xf32>
    %cst_63 = arith.constant 0.000000e+00 : f32
    %128 = vector.broadcast %cst_63 : f32 to vector<8x32xf32>
    %129 = arith.maximumf %127, %128 : vector<8x32xf32>
    %cst_64 = arith.constant dense<0.000000e+00> : vector<8x64xf32>
    %130 = tpu.matmul %129, %73, %cst_64 {dimension_numbers = #tpu.dot_dimension_numbers<[1], [0], [0], [1], [0, 0, 1, 1], [], []>} : vector<8x32xf32>, vector<32x64xf32>, vector<8x64xf32> -> vector<8x64xf32>
    %131 = vector.broadcast %80 : vector<1x64xf32> to vector<8x64xf32>
    %132 = arith.addf %130, %131 : vector<8x64xf32>
    %cst_65 = arith.constant dense<0.000000e+00> : vector<64xf32>
    %133 = vector.multi_reduction <add>, %132, %cst_65 [0] : vector<8x64xf32> to vector<64xf32>
    %134 = vector.shape_cast %133 : vector<64xf32> to vector<1x64xf32>
    %cst_66 = arith.constant 8.000000e+00 : f32
    %135 = vector.broadcast %cst_66 : f32 to vector<1x64xf32>
    %136 = arith.divf %134, %135 : vector<1x64xf32>
    %137 = vector.broadcast %136 : vector<1x64xf32> to vector<8x64xf32>
    %138 = arith.subf %132, %137 : vector<8x64xf32>
    %139 = arith.mulf %138, %138 : vector<8x64xf32>
    %cst_67 = arith.constant dense<0.000000e+00> : vector<64xf32>
    %140 = vector.multi_reduction <add>, %139, %cst_67 [0] : vector<8x64xf32> to vector<64xf32>
    %141 = vector.shape_cast %140 : vector<64xf32> to vector<1x64xf32>
    %cst_68 = arith.constant 8.000000e+00 : f32
    %142 = vector.broadcast %cst_68 : f32 to vector<1x64xf32>
    %143 = arith.divf %141, %142 : vector<1x64xf32>
    %cst_69 = arith.constant 9.99999974E-6 : f32
    %144 = vector.broadcast %cst_69 : f32 to vector<1x64xf32>
    %145 = arith.addf %143, %144 : vector<1x64xf32>
    %146 = math.rsqrt %145 : vector<1x64xf32>
    %147 = vector.broadcast %146 : vector<1x64xf32> to vector<8x64xf32>
    %148 = arith.mulf %138, %147 : vector<8x64xf32>
    %cst_70 = arith.constant dense<0.000000e+00> : vector<8x16xf32>
    %149 = tpu.matmul %148, %74, %cst_70 {dimension_numbers = #tpu.dot_dimension_numbers<[1], [0], [0], [1], [0, 0, 1, 1], [], []>} : vector<8x64xf32>, vector<64x16xf32>, vector<8x16xf32> -> vector<8x16xf32>
    %cst_71 = arith.constant dense<0.000000e+00> : vector<16xf32>
    %150 = vector.multi_reduction <add>, %149, %cst_71 [0] : vector<8x16xf32> to vector<16xf32>
    %151 = vector.shape_cast %150 : vector<16xf32> to vector<1x16xf32>
    %cst_72 = arith.constant 8.000000e+00 : f32
    %152 = vector.broadcast %cst_72 : f32 to vector<1x16xf32>
    %153 = arith.divf %151, %152 : vector<1x16xf32>
    %154 = vector.broadcast %153 : vector<1x16xf32> to vector<8x16xf32>
    %155 = arith.subf %149, %154 : vector<8x16xf32>
    %156 = arith.mulf %155, %155 : vector<8x16xf32>
    %cst_73 = arith.constant dense<0.000000e+00> : vector<16xf32>
    %157 = vector.multi_reduction <add>, %156, %cst_73 [0] : vector<8x16xf32> to vector<16xf32>
    %158 = vector.shape_cast %157 : vector<16xf32> to vector<1x16xf32>
    %cst_74 = arith.constant 8.000000e+00 : f32
    %159 = vector.broadcast %cst_74 : f32 to vector<1x16xf32>
    %160 = arith.divf %158, %159 : vector<1x16xf32>
    %cst_75 = arith.constant 9.99999974E-6 : f32
    %161 = vector.broadcast %cst_75 : f32 to vector<1x16xf32>
    %162 = arith.addf %160, %161 : vector<1x16xf32>
    %163 = math.rsqrt %162 : vector<1x16xf32>
    %164 = vector.broadcast %163 : vector<1x16xf32> to vector<8x16xf32>
    %165 = arith.mulf %155, %164 : vector<8x16xf32>
    %166 = vector.broadcast %81 : vector<1x16xf32> to vector<8x16xf32>
    %167 = arith.mulf %165, %166 : vector<8x16xf32>
    %168 = vector.broadcast %82 : vector<1x16xf32> to vector<8x16xf32>
    %169 = arith.addf %167, %168 : vector<8x16xf32>
    %cst_76 = arith.constant 0.000000e+00 : f32
    %170 = vector.broadcast %cst_76 : f32 to vector<8x16xf32>
    %171 = arith.maximumf %169, %170 : vector<8x16xf32>
    %cst_77 = arith.constant dense<0.000000e+00> : vector<8x64xf32>
    %172 = tpu.matmul %171, %75, %cst_77 {dimension_numbers = #tpu.dot_dimension_numbers<[1], [1], [0], [0], [0, 0, 1, 0], [], []>} : vector<8x16xf32>, vector<64x16xf32>, vector<8x64xf32> -> vector<8x64xf32>
    %173 = vector.broadcast %83 : vector<1x64xf32> to vector<8x64xf32>
    %174 = arith.addf %172, %173 : vector<8x64xf32>
    %175 = tpu.concatenate %174, %148 in 1 : vector<8x64xf32>, vector<8x64xf32> -> vector<8x128xf32>
    %c0_78 = arith.constant 0 : index
    %c0_79 = arith.constant 0 : index
    %176 = vector.load %arg4[%c0_78, %c0_79] : memref<8x128xf32, #tpu.memory_space<vmem>>, vector<8x128xf32>
    tpu.vector_store %arg4[%c0_78, %c0_79], %175 {strides = array<i32>} : memref<8x128xf32, #tpu.memory_space<vmem>>, vector<8x128xf32>,
    return
  }
}

</mosaic_0001>

<llo_original>
// kernel: simsiam_forward.1
$region0: #{simsiam_forward.1}
  #allocation0 [shape = 'u32[]', space=smem, size = 0x4, offset = 0x4, fixed_abs, tag = 'smem constant byte address 0x4 - core index']
  #allocation1 [shape = 'u32[72,128]{1,0:T(1,128)}', space=vmem, size = 0x9000, scoped, tag = 'internal scratch']
  #allocation2 [shape = 'bf16[48,2560]{1,0:T(8,128)(2,1)}', space=vmem, size = 0x3c000, scoped, tag = 'scratch operand']
  %s0 = inlined_call_operand.vmem [shape: bf16[16,2688], index: 0, kind: input, shape index: {}]
  %s1 = inlined_call_operand.vmem [shape: s32[1,2560], index: 1, kind: input, shape index: {}]
  %s2 = inlined_call_operand.vmem [shape: bf16[32,48], index: 2, kind: input, shape index: {}]
  %s3 = inlined_call_operand.vmem [shape: f32[104,128], index: 3, kind: input, shape index: {}]
  %s4 = inlined_call_operand.vmem [shape: f32[8,128], index: 4, kind: output, shape index: {}]
  %s5 = sld [smem:[#allocation0]]
  $region26: #{simsiam_forward.1} parent=0
    _
  %s7 = ssub.s32 1, %s5
  %s8 = scalar_select 0, %s7, %s5
  // Predicated region
  $region2: #{simsiam_forward.1} parent=0 // pred_check
    _
  $region3: #{simsiam_forward.1} parent=0 // pred_check_branch
    %10 = sbr.rel (0) target = $region5
  $region4: #{simsiam_forward.1} parent=0 // pred_region
    _
  $region5: #{simsiam_forward.1} parent=0 // pred_fallthru
    _
  // Predicated region
  $region6: #{simsiam_forward.1} parent=0 // pred_check
    _
  $region7: #{simsiam_forward.1} parent=0 // pred_check_branch
    %12 = sbr.rel (0) target = $region9
  $region8: #{simsiam_forward.1} parent=0 // pred_region
    _
  $region9: #{simsiam_forward.1} parent=0 // pred_fallthru
    _
  // Predicated region
  $region10: #{simsiam_forward.1} parent=0 // pred_check
    _
  $region11: #{simsiam_forward.1} parent=0 // pred_check_branch
    %14 = sbr.rel (0) target = $region13
  $region12: #{simsiam_forward.1} parent=0 // pred_region
    _
  $region13: #{simsiam_forward.1} parent=0 // pred_fallthru
    _
  // Predicated region
  $region14: #{simsiam_forward.1} parent=0 // pred_check
    _
  $region15: #{simsiam_forward.1} parent=0 // pred_check_branch
    %16 = sbr.rel (0) target = $region17
  $region16: #{simsiam_forward.1} parent=0 // pred_region
    _
  $region17: #{simsiam_forward.1} parent=0 // pred_fallthru
    _
  %v18 = vld [vmem:[%s0] sm:$0xff]
  %v19 = vld [vmem:[%s0 + $0x8] sm:$0xff]
  %v20 = vld [vmem:[%s0 + $0x10] sm:$0xff]
  %v21 = vld [vmem:[%s0 + $0x18] sm:$0xff]
  %v22 = vld [vmem:[%s0 + $0x20] sm:$0xff]
  %v23 = vld [vmem:[%s0 + $0x28] sm:$0xff]
  %v24 = vld [vmem:[%s0 + $0x30] sm:$0xff]
  %v25 = vld [vmem:[%s0 + $0x38] sm:$0xff]
  %v26 = vld [vmem:[%s0 + $0x40] sm:$0xff]
  %v27 = vld [vmem:[%s0 + $0x48] sm:$0xff]
  %v28 = vld [vmem:[%s0 + $0x50] sm:$0xf]
  %v29 = vld [vmem:[%s0 + $0x54] sm:$0xff]
  %v30 = vld [vmem:[%s0 + $0x5c] sm:$0xff]
  %v31 = vld [vmem:[%s0 + $0x64] sm:$0xff]
  %v32 = vld [vmem:[%s0 + $0x6c] sm:$0xff]
  %v33 = vld [vmem:[%s0 + $0x74] sm:$0xff]
  %v34 = vld [vmem:[%s0 + $0x7c] sm:$0xff]
  %v35 = vld [vmem:[%s0 + $0x84] sm:$0xff]
  %v36 = vld [vmem:[%s0 + $0x8c] sm:$0xff]
  %v37 = vld [vmem:[%s0 + $0x94] sm:$0xff]
  %v38 = vld [vmem:[%s0 + $0x9c] sm:$0xff]
  %v39 = vld [vmem:[%s0 + $0xa4] sm:$0xf]
  %40 = vst [vmem:[#allocation2] sm:$0xff] %v18
  %41 = vst [vmem:[#allocation2 + $0x8] sm:$0xff] %v19
  %42 = vst [vmem:[#allocation2 + $0x10] sm:$0xff] %v20
  %43 = vst [vmem:[#allocation2 + $0x18] sm:$0xff] %v21
  %44 = vst [vmem:[#allocation2 + $0x20] sm:$0xff] %v22
  %45 = vst [vmem:[#allocation2 + $0x28] sm:$0xff] %v23
  %46 = vst [vmem:[#allocation2 + $0x30] sm:$0xff] %v24
  %47 = vst [vmem:[#allocation2 + $0x38] sm:$0xff] %v25
  %48 = vst [vmem:[#allocation2 + $0x40] sm:$0xff] %v26
  %49 = vst [vmem:[#allocation2 + $0x48] sm:$0xff] %v27
  %50 = vst [vmem:[#allocation2 + $0x50] sm:$0xff] %v29
  %51 = vst [vmem:[#allocation2 + $0x58] sm:$0xff] %v30
  %52 = vst [vmem:[#allocation2 + $0x60] sm:$0xff] %v31
  %53 = vst [vmem:[#allocation2 + $0x68] sm:$0xff] %v32
  %54 = vst [vmem:[#allocation2 + $0x70] sm:$0xff] %v33
  %55 = vst [vmem:[#allocation2 + $0x78] sm:$0xff] %v34
  %56 = vst [vmem:[#allocation2 + $0x80] sm:$0xff] %v35
  %57 = vst [vmem:[#allocation2 + $0x88] sm:$0xff] %v36
  %58 = vst [vmem:[#allocation2 + $0x90] sm:$0xff] %v37
  %59 = vst [vmem:[#allocation2 + $0x98] sm:$0xff] %v38
  %82 = vrot.lane.b32.xlu0 %v18, 127
  %v83 = vpop.permute.xlu0 %82
  %84 = vrot.lane.b32.xlu0 %v19, 127
  %v85 = vpop.permute.xlu0 %84
  %86 = vrot.lane.b32.xlu0 %v20, 127
  %v87 = vpop.permute.xlu0 %86
  %88 = vrot.lane.b32.xlu0 %v21, 127
  %v89 = vpop.permute.xlu0 %88
  %90 = vrot.lane.b32.xlu0 %v22, 127
  %v91 = vpop.permute.xlu0 %90
  %92 = vrot.lane.b32.xlu0 %v23, 127
  %v93 = vpop.permute.xlu0 %92
  %94 = vrot.lane.b32.xlu0 %v24, 127
  %v95 = vpop.permute.xlu0 %94
  %96 = vrot.lane.b32.xlu0 %v25, 127
  %v97 = vpop.permute.xlu0 %96
  %98 = vrot.lane.b32.xlu0 %v26, 127
  %v99 = vpop.permute.xlu0 %98
  %100 = vrot.lane.b32.xlu0 %v27, 127
  %v101 = vpop.permute.xlu0 %100
  %102 = vrot.lane.b32.xlu0 %v28, 127
  %v103 = vpop.permute.xlu0 %102
  %104 = vrot.lane.b32.xlu0 %v29, 127
  %v105 = vpop.permute.xlu0 %104
  %106 = vrot.lane.b32.xlu0 %v30, 127
  %v107 = vpop.permute.xlu0 %106
  %108 = vrot.lane.b32.xlu0 %v31, 127
  %v109 = vpop.permute.xlu0 %108
  %110 = vrot.lane.b32.xlu0 %v32, 127
  %v111 = vpop.permute.xlu0 %110
  %112 = vrot.lane.b32.xlu0 %v33, 127
  %v113 = vpop.permute.xlu0 %112
  %114 = vrot.lane.b32.xlu0 %v34, 127
  %v115 = vpop.permute.xlu0 %114
  %116 = vrot.lane.b32.xlu0 %v35, 127
  %v117 = vpop.permute.xlu0 %116
  %118 = vrot.lane.b32.xlu0 %v36, 127
  %v119 = vpop.permute.xlu0 %118
  %120 = vrot.lane.b32.xlu0 %v37, 127
  %v121 = vpop.permute.xlu0 %120
  %122 = vrot.lane.b32.xlu0 %v38, 127
  %v123 = vpop.permute.xlu0 %122
  %124 = vrot.lane.b32.xlu0 %v39, 127
  %v125 = vpop.permute.xlu0 %124
  %v126 = vrot.slane %v83, 4
  %v127 = vrot.slane %v85, 4
  %v128 = vrot.slane %v87, 4
  %v129 = vrot.slane %v89, 4
  %v130 = vrot.slane %v91, 4
  %v131 = vrot.slane %v93, 4
  %v132 = vrot.slane %v95, 4
  %v133 = vrot.slane %v97, 4
  %v134 = vrot.slane %v99, 4
  %v135 = vrot.slane %v101, 4
  %v136 = vrot.slane %v103, 4
  %v137 = vrot.slane %v105, 4
  %v138 = vrot.slane %v107, 4
  %v139 = vrot.slane %v109, 4
  %v140 = vrot.slane %v111, 4
  %v141 = vrot.slane %v113, 4
  %v142 = vrot.slane %v115, 4
  %v143 = vrot.slane %v117, 4
  %v144 = vrot.slane %v119, 4
  %v145 = vrot.slane %v121, 4
  %v146 = vrot.slane %v123, 4
  %v147 = vrot.slane %v125, 4
  %vm148 = vcmask 1043456
  %v149 = vsel %vm148, %v126, %v127
  %vm150 = vcmask 1039360
  %v151 = vsel %vm150, %v83, %v149
  %v152 = vsel %vm148, %v127, %v128
  %v153 = vsel %vm150, %v85, %v152
  %v154 = vsel %vm148, %v128, %v129
  %v155 = vsel %vm150, %v87, %v154
  %v156 = vsel %vm148, %v129, %v130
  %v157 = vsel %vm150, %v89, %v156
  %v158 = vsel %vm148, %v130, %v131
  %v159 = vsel %vm150, %v91, %v158
  %v160 = vsel %vm148, %v131, %v132
  %v161 = vsel %vm150, %v93, %v160
  %v162 = vsel %vm148, %v132, %v133
  %v163 = vsel %vm150, %v95, %v162
  %v164 = vsel %vm148, %v133, %v134
  %v165 = vsel %vm150, %v97, %v164
  %v166 = vsel %vm148, %v134, %v135
  %v167 = vsel %vm150, %v99, %v166
  %v168 = vsel %vm148, %v135, %v136
  %v169 = vsel %vm150, %v101, %v168
  %v170 = vsel %vm148, %v137, %v138
  %v171 = vsel %vm150, %v105, %v170
  %v172 = vsel %vm148, %v138, %v139
  %v173 = vsel %vm150, %v107, %v172
  %v174 = vsel %vm148, %v139, %v140
  %v175 = vsel %vm150, %v109, %v174
  %v176 = vsel %vm148, %v140, %v141
  %v177 = vsel %vm150, %v111, %v176
  %v178 = vsel %vm148, %v141, %v142
  %v179 = vsel %vm150, %v113, %v178
  %v180 = vsel %vm148, %v142, %v143
  %v181 = vsel %vm150, %v115, %v180
  %v182 = vsel %vm148, %v143, %v144
  %v183 = vsel %vm150, %v117, %v182
  %v184 = vsel %vm148, %v144, %v145
  %v185 = vsel %vm150, %v119, %v184
  %v186 = vsel %vm148, %v145, %v146
  %v187 = vsel %vm150, %v121, %v186
  %v188 = vsel %vm148, %v146, %v147
  %v189 = vsel %vm150, %v123, %v188
  %210 = vst [vmem:[#allocation2 + $0xa0] sm:$0xff] %v151
  %211 = vst [vmem:[#allocation2 + $0xa8] sm:$0xff] %v153
  %212 = vst [vmem:[#allocation2 + $0xb0] sm:$0xff] %v155
  %213 = vst [vmem:[#allocation2 + $0xb8] sm:$0xff] %v157
  %214 = vst [vmem:[#allocation2 + $0xc0] sm:$0xff] %v159
  %215 = vst [vmem:[#allocation2 + $0xc8] sm:$0xff] %v161
  %216 = vst [vmem:[#allocation2 + $0xd0] sm:$0xff] %v163
  %217 = vst [vmem:[#allocation2 + $0xd8] sm:$0xff] %v165
  %218 = vst [vmem:[#allocation2 + $0xe0] sm:$0xff] %v167
  %219 = vst [vmem:[#allocation2 + $0xe8] sm:$0xff] %v169
  %220 = vst [vmem:[#allocation2 + $0xf0] sm:$0xff] %v171
  %221 = vst [vmem:[#allocation2 + $0xf8] sm:$0xff] %v173
  %222 = vst [vmem:[#allocation2 + $0x100] sm:$0xff] %v175
  %223 = vst [vmem:[#allocation2 + $0x108] sm:$0xff] %v177
  %224 = vst [vmem:[#allocation2 + $0x110] sm:$0xff] %v179
  %225 = vst [vmem:[#allocation2 + $0x118] sm:$0xff] %v181
  %226 = vst [vmem:[#allocation2 + $0x120] sm:$0xff] %v183
  %227 = vst [vmem:[#allocation2 + $0x128] sm:$0xff] %v185
  %228 = vst [vmem:[#allocation2 + $0x130] sm:$0xff] %v187
  %229 = vst [vmem:[#allocation2 + $0x138] sm:$0xff] %v189
  %230 = vrot.lane.b32.xlu0 %v18, 126
  %v231 = vpop.permute.xlu0 %230
  %232 = vrot.lane.b32.xlu0 %v19, 126
  %v233 = vpop.permute.xlu0 %232
  %234 = vrot.lane.b32.xlu0 %v20, 126
  %v235 = vpop.permute.xlu0 %234
  %236 = vrot.lane.b32.xlu0 %v21, 126
  %v237 = vpop.permute.xlu0 %236
  %238 = vrot.lane.b32.xlu0 %v22, 126
  %v239 = vpop.permute.xlu0 %238
  %240 = vrot.lane.b32.xlu0 %v23, 126
  %v241 = vpop.permute.xlu0 %240
  %242 = vrot.lane.b32.xlu0 %v24, 126
  %v243 = vpop.permute.xlu0 %242
  %244 = vrot.lane.b32.xlu0 %v25, 126
  %v245 = vpop.permute.xlu0 %244
  %246 = vrot.lane.b32.xlu0 %v26, 126
  %v247 = vpop.permute.xlu0 %246
  %248 = vrot.lane.b32.xlu0 %v27, 126
  %v249 = vpop.permute.xlu0 %248
  %250 = vrot.lane.b32.xlu0 %v28, 126
  %v251 = vpop.permute.xlu0 %250
  %252 = vrot.lane.b32.xlu0 %v29, 126
  %v253 = vpop.permute.xlu0 %252
  %254 = vrot.lane.b32.xlu0 %v30, 126
  %v255 = vpop.permute.xlu0 %254
  %256 = vrot.lane.b32.xlu0 %v31, 126
  %v257 = vpop.permute.xlu0 %256
  %258 = vrot.lane.b32.xlu0 %v32, 126
  %v259 = vpop.permute.xlu0 %258
  %260 = vrot.lane.b32.xlu0 %v33, 126
  %v261 = vpop.permute.xlu0 %260
  %262 = vrot.lane.b32.xlu0 %v34, 126
  %v263 = vpop.permute.xlu0 %262
  %264 = vrot.lane.b32.xlu0 %v35, 126
  %v265 = vpop.permute.xlu0 %264
  %266 = vrot.lane.b32.xlu0 %v36, 126
  %v267 = vpop.permute.xlu0 %266
  %268 = vrot.lane.b32.xlu0 %v37, 126
  %v269 = vpop.permute.xlu0 %268
  %270 = vrot.lane.b32.xlu0 %v38, 126
  %v271 = vpop.permute.xlu0 %270
  %272 = vrot.lane.b32.xlu0 %v39, 126
  %v273 = vpop.permute.xlu0 %272
  %v274 = vrot.slane %v231, 4
  %v275 = vrot.slane %v233, 4
  %v276 = vrot.slane %v235, 4
  %v277 = vrot.slane %v237, 4
  %v278 = vrot.slane %v239, 4
  %v279 = vrot.slane %v241, 4
  %v280 = vrot.slane %v243, 4
  %v281 = vrot.slane %v245, 4
  %v282 = vrot.slane %v247, 4
  %v283 = vrot.slane %v249, 4
  %v284 = vrot.slane %v251, 4
  %v285 = vrot.slane %v253, 4
  %v286 = vrot.slane %v255, 4
  %v287 = vrot.slane %v257, 4
  %v288 = vrot.slane %v259, 4
  %v289 = vrot.slane %v261, 4
  %v290 = vrot.slane %v263, 4
  %v291 = vrot.slane %v265, 4
  %v292 = vrot.slane %v267, 4
  %v293 = vrot.slane %v269, 4
  %v294 = vrot.slane %v271, 4
  %v295 = vrot.slane %v273, 4
  %v296 = vsel %vm148, %v274, %v275
  %vm297 = vcmask 1031168
  %v298 = vsel %vm297, %v231, %v296
  %v299 = vsel %vm148, %v275, %v276
  %v300 = vsel %vm297, %v233, %v299
  %v301 = vsel %vm148, %v276, %v277
  %v302 = vsel %vm297, %v235, %v301
  %v303 = vsel %vm148, %v277, %v278
  %v304 = vsel %vm297, %v237, %v303
  %v305 = vsel %vm148, %v278, %v279
  %v306 = vsel %vm297, %v239, %v305
  %v307 = vsel %vm148, %v279, %v280
  %v308 = vsel %vm297, %v241, %v307
  %v309 = vsel %vm148, %v280, %v281
  %v310 = vsel %vm297, %v243, %v309
  %v311 = vsel %vm148, %v281, %v282
  %v312 = vsel %vm297, %v245, %v311
  %v313 = vsel %vm148, %v282, %v283
  %v314 = vsel %vm297, %v247, %v313
  %v315 = vsel %vm148, %v283, %v284
  %v316 = vsel %vm297, %v249, %v315
  %v317 = vsel %vm148, %v285, %v286
  %v318 = vsel %vm297, %v253, %v317
  %v319 = vsel %vm148, %v286, %v287
  %v320 = vsel %vm297, %v255, %v319
  %v321 = vsel %vm148, %v287, %v288
  %v322 = vsel %vm297, %v257, %v321
  %v323 = vsel %vm148, %v288, %v289
  %v324 = vsel %vm297, %v259, %v323
  %v325 = vsel %vm148, %v289, %v290
  %v326 = vsel %vm297, %v261, %v325
  %v327 = vsel %vm148, %v290, %v291
  %v328 = vsel %vm297, %v263, %v327
  %v329 = vsel %vm148, %v291, %v292
  %v330 = vsel %vm297, %v265, %v329
  %v331 = vsel %vm148, %v292, %v293
  %v332 = vsel %vm297, %v267, %v331
  %v333 = vsel %vm148, %v293, %v294
  %v334 = vsel %vm297, %v269, %v333
  %v335 = vsel %vm148, %v294, %v295
  %v336 = vsel %vm297, %v271, %v335
  %357 = vst [vmem:[#allocation2 + $0x140] sm:$0xff] %v298
  %358 = vst [vmem:[#allocation2 + $0x148] sm:$0xff] %v300
  %359 = vst [vmem:[#allocation2 + $0x150] sm:$0xff] %v302
  %360 = vst [vmem:[#allocation2 + $0x158] sm:$0xff] %v304
  %361 = vst [vmem:[#allocation2 + $0x160] sm:$0xff] %v306
  %362 = vst [vmem:[#allocation2 + $0x168] sm:$0xff] %v308
  %363 = vst [vmem:[#allocation2 + $0x170] sm:$0xff] %v310
  %364 = vst [vmem:[#allocation2 + $0x178] sm:$0xff] %v312
  %365 = vst [vmem:[#allocation2 + $0x180] sm:$0xff] %v314
  %366 = vst [vmem:[#allocation2 + $0x188] sm:$0xff] %v316
  %367 = vst [vmem:[#allocation2 + $0x190] sm:$0xff] %v318
  %368 = vst [vmem:[#allocation2 + $0x198] sm:$0xff] %v320
  %369 = vst [vmem:[#allocation2 + $0x1a0] sm:$0xff] %v322
  %370 = vst [vmem:[#allocation2 + $0x1a8] sm:$0xff] %v324
  %371 = vst [vmem:[#allocation2 + $0x1b0] sm:$0xff] %v326
  %372 = vst [vmem:[#allocation2 + $0x1b8] sm:$0xff] %v328
  %373 = vst [vmem:[#allocation2 + $0x1c0] sm:$0xff] %v330
  %374 = vst [vmem:[#allocation2 + $0x1c8] sm:$0xff] %v332
  %375 = vst [vmem:[#allocation2 + $0x1d0] sm:$0xff] %v334
  %376 = vst [vmem:[#allocation2 + $0x1d8] sm:$0xff] %v336
  %v377 = vld [vmem:[%s2] sm:$0xf]
  %v378 = vld [vmem:[%s2 + $0x4] sm:$0xf]
  %v379 = vld [vmem:[%s2 + $0x8] sm:$0xf]
  %v380 = vld [vmem:[%s2 + $0xc] sm:$0xf]
  %v381 = vlaneseq
  %v382 = vshrl.u32 %v381, 7
  %v383 = vld [vmem:[#allocation2] sm:$0xff]
  %v384 = vld [vmem:[#allocation2 + $0x8] sm:$0xff]
  %v385 = vld [vmem:[#allocation2 + $0x50] sm:$0xff]
  %v386 = vld [vmem:[#allocation2 + $0x58] sm:$0xff]
  %v387 = vld [vmem:[#allocation2 + $0xa0] sm:$0xff]
  %v388 = vld [vmem:[#allocation2 + $0xa8] sm:$0xff]
  %v389 = vld [vmem:[#allocation2 + $0xf0] sm:$0xff]
  %v390 = vld [vmem:[#allocation2 + $0xf8] sm:$0xff]
  %v391 = vld [vmem:[#allocation2 + $0x140] sm:$0xff]
  %v392 = vld [vmem:[#allocation2 + $0x148] sm:$0xff]
  %v393 = vld [vmem:[#allocation2 + $0x190] sm:$0xff]
  %v394 = vld [vmem:[#allocation2 + $0x198] sm:$0xff]
  %v399 = vunpack.c.l.b16 %v377
  %v400 = vunpack.c.l.b16 %v378
  %v401 = vunpack.c.l.b16 %v379
  %v402 = vunpack.c.l.b16 %v380
  %v403 = vpack.c.b16 %v400, %v399
  %v404 = vpack.c.b16 %v402, %v401
  %v417 = vunpack.c.l.b16 %v383
  %v418 = vunpack.c.h.b16 %v383
  %v419 = vunpack.c.l.b16 %v384
  %v420 = vunpack.c.h.b16 %v384
  %v421 = vunpack.c.l.b16 %v385
  %v422 = vunpack.c.h.b16 %v385
  %v423 = vunpack.c.l.b16 %v386
  %v424 = vunpack.c.h.b16 %v386
  %v425 = vunpack.c.l.b16 %v387
  %v426 = vunpack.c.h.b16 %v387
  %v427 = vunpack.c.l.b16 %v388
  %v428 = vunpack.c.h.b16 %v388
  %v429 = vunpack.c.l.b16 %v389
  %v430 = vunpack.c.h.b16 %v389
  %v431 = vunpack.c.l.b16 %v390
  %v432 = vunpack.c.h.b16 %v390
  %v433 = vunpack.c.l.b16 %v391
  %v434 = vunpack.c.h.b16 %v391
  %v435 = vunpack.c.l.b16 %v392
  %v436 = vunpack.c.h.b16 %v392
  %v437 = vunpack.c.l.b16 %v393
  %v438 = vunpack.c.h.b16 %v393
  %v439 = vunpack.c.l.b16 %v394
  %v440 = vunpack.c.h.b16 %v394
  %v441 = vpack.c.b16 %v421, %v417
  %v442 = vpack.c.b16 %v422, %v418
  %v443 = vpack.c.b16 %v423, %v419
  %v444 = vpack.c.b16 %v424, %v420
  %v445 = vpack.c.b16 %v429, %v425
  %v446 = vpack.c.b16 %v430, %v426
  %v447 = vpack.c.b16 %v431, %v427
  %v448 = vpack.c.b16 %v432, %v428
  %v449 = vpack.c.b16 %v437, %v433
  %v450 = vpack.c.b16 %v438, %v434
  %v451 = vpack.c.b16 %v439, %v435
  %v452 = vpack.c.b16 %v440, %v436
  %vm465 = vcmask 392192
  %v467 = vsel %vm465, %v403, 0
  %v470 = vsel %vm465, %v404, 0
  %472 = vmatpush.bf16.msra.mxu0 0
  %473 = vmatpush.bf16.msra.mxu0 0
  %474 = vmatpush.bf16.msra.mxu0 0
  %475 = vmatpush.bf16.msra.mxu0 0
  %476 = vmatpush.bf16.msra.mxu0 0
  %477 = vmatpush.bf16.msra.mxu0 %v449
  %478 = vmatpush.bf16.msra.mxu0 %v445
  %479 = vmatpush.bf16.msra.mxu0 %v441
  %480 = vmatmul.bf16.gmra.mxu0 %v467
  %v481 = vpop.f32.mrf.mxu0
  %v482 = vadd.f32 0.0, %v481
  %v483 = vpop.f32.mrf.mxu0
  %v484 = vadd.f32 0.0, %v483
  %485 = vmatmul.bf16.gmra.mxu0 %v470
  %v486 = vpop.f32.mrf.mxu0
  %v487 = vadd.f32 0.0, %v486
  %v488 = vpop.f32.mrf.mxu0
  %v489 = vadd.f32 0.0, %v488
  %490 = vdwg.mxu0
  %491 = vmatpush.bf16.msra.mxu0 0
  %492 = vmatpush.bf16.msra.mxu0 0
  %493 = vmatpush.bf16.msra.mxu0 0
  %494 = vmatpush.bf16.msra.mxu0 0
  %495 = vmatpush.bf16.msra.mxu0 0
  %496 = vmatpush.bf16.msra.mxu0 %v450
  %497 = vmatpush.bf16.msra.mxu0 %v446
  %498 = vmatpush.bf16.msra.mxu0 %v442
  %499 = vmatmul.bf16.gmra.mxu0 %v467
  %v500 = vpop.f32.mrf.mxu0
  %v501 = vadd.f32 0.0, %v500
  %v502 = vpop.f32.mrf.mxu0
  %v503 = vadd.f32 0.0, %v502
  %504 = vmatmul.bf16.gmra.mxu0 %v470
  %v505 = vpop.f32.mrf.mxu0
  %v506 = vadd.f32 0.0, %v505
  %v507 = vpop.f32.mrf.mxu0
  %v508 = vadd.f32 0.0, %v507
  %509 = vdwg.mxu0
  %510 = vmatpush.bf16.msra.mxu0 0
  %511 = vmatpush.bf16.msra.mxu0 0
  %512 = vmatpush.bf16.msra.mxu0 0
  %513 = vmatpush.bf16.msra.mxu0 0
  %514 = vmatpush.bf16.msra.mxu0 0
  %515 = vmatpush.bf16.msra.mxu0 %v451
  %516 = vmatpush.bf16.msra.mxu0 %v447
  %517 = vmatpush.bf16.msra.mxu0 %v443
  %518 = vmatmul.bf16.gmra.mxu0 %v467
  %v519 = vpop.f32.mrf.mxu0
  %v520 = vadd.f32 0.0, %v519
  %v521 = vpop.f32.mrf.mxu0
  %v522 = vadd.f32 0.0, %v521
  %523 = vmatmul.bf16.gmra.mxu0 %v470
  %v524 = vpop.f32.mrf.mxu0
  %v525 = vadd.f32 0.0, %v524
  %v526 = vpop.f32.mrf.mxu0
  %v527 = vadd.f32 0.0, %v526
  %528 = vdwg.mxu0
  %529 = vmatpush.bf16.msra.mxu0 0
  %530 = vmatpush.bf16.msra.mxu0 0
  %531 = vmatpush.bf16.msra.mxu0 0
  %532 = vmatpush.bf16.msra.mxu0 0
  %533 = vmatpush.bf16.msra.mxu0 0
  %534 = vmatpush.bf16.msra.mxu0 %v452
  %535 = vmatpush.bf16.msra.mxu0 %v448
  %536 = vmatpush.bf16.msra.mxu0 %v444
  %537 = vmatmul.bf16.gmra.mxu0 %v467
  %v538 = vpop.f32.mrf.mxu0
  %v539 = vadd.f32 0.0, %v538
  %v540 = vpop.f32.mrf.mxu0
  %v541 = vadd.f32 0.0, %v540
  %542 = vmatmul.bf16.gmra.mxu0 %v470
  %v543 = vpop.f32.mrf.mxu0
  %v544 = vadd.f32 0.0, %v543
  %v545 = vpop.f32.mrf.mxu0
  %v546 = vadd.f32 0.0, %v545
  %547 = vdwg.mxu0
  %v548 = vmax.f32 %v482, 0.0
  %v549 = vmax.f32 %v501, 0.0
  %v550 = vmax.f32 %v520, 0.0
  %v551 = vmax.f32 %v539, 0.0
  %v552 = vmax.f32 %v484, 0.0
  %v553 = vmax.f32 %v503, 0.0
  %v554 = vmax.f32 %v522, 0.0
  %v555 = vmax.f32 %v541, 0.0
  %v556 = vmax.f32 %v487, 0.0
  %v557 = vmax.f32 %v506, 0.0
  %v558 = vmax.f32 %v525, 0.0
  %v559 = vmax.f32 %v544, 0.0
  %v560 = vmax.f32 %v489, 0.0
  %v561 = vmax.f32 %v508, 0.0
  %v562 = vmax.f32 %v527, 0.0
  %v563 = vmax.f32 %v546, 0.0
  %v564 = vld [vmem:[%s1] sm:$0xf]
  %v565 = vperm.slane %v564, 0
  %v566 = vperm.slane %v564, 1
  %v567 = vperm.slane %v564, 2
  %v568 = vperm.slane %v564, 3
  %vm569 = vcmp.eq.s32.totalorder %v565, %v382
  %vm570 = vcmp.eq.s32.totalorder %v566, %v382
  %vm571 = vcmp.eq.s32.totalorder %v567, %v382
  %vm572 = vcmp.eq.s32.totalorder %v568, %v382
  %v573 = vsel %vm569, 0.00390625, 0.0
  %v574 = vsel %vm570, 0.00390625, 0.0
  %v575 = vsel %vm571, 0.00390625, 0.0
  %v576 = vsel %vm572, 0.00390625, 0.0
  %v577 = vld [vmem:[#allocation2 + $0x10] sm:$0xff]
  %v578 = vld [vmem:[#allocation2 + $0x18] sm:$0xff]
  %v579 = vld [vmem:[#allocation2 + $0x60] sm:$0xff]
  %v580 = vld [vmem:[#allocation2 + $0x68] sm:$0xff]
  %v581 = vld [vmem:[#allocation2 + $0xb0] sm:$0xff]
  %v582 = vld [vmem:[#allocation2 + $0xb8] sm:$0xff]
  %v583 = vld [vmem:[#allocation2 + $0x100] sm:$0xff]
  %v584 = vld [vmem:[#allocation2 + $0x108] sm:$0xff]
  %v585 = vld [vmem:[#allocation2 + $0x150] sm:$0xff]
  %v586 = vld [vmem:[#allocation2 + $0x158] sm:$0xff]
  %v587 = vld [vmem:[#allocation2 + $0x1a0] sm:$0xff]
  %v588 = vld [vmem:[#allocation2 + $0x1a8] sm:$0xff]
  %v601 = vunpack.c.l.b16 %v577
  %v602 = vunpack.c.h.b16 %v577
  %v603 = vunpack.c.l.b16 %v578
  %v604 = vunpack.c.h.b16 %v578
  %v605 = vunpack.c.l.b16 %v579
  %v606 = vunpack.c.h.b16 %v579
  %v607 = vunpack.c.l.b16 %v580
  %v608 = vunpack.c.h.b16 %v580
  %v609 = vunpack.c.l.b16 %v581
  %v610 = vunpack.c.h.b16 %v581
  %v611 = vunpack.c.l.b16 %v582
  %v612 = vunpack.c.h.b16 %v582
  %v613 = vunpack.c.l.b16 %v583
  %v614 = vunpack.c.h.b16 %v583
  %v615 = vunpack.c.l.b16 %v584
  %v616 = vunpack.c.h.b16 %v584
  %v617 = vunpack.c.l.b16 %v585
  %v618 = vunpack.c.h.b16 %v585
  %v619 = vunpack.c.l.b16 %v586
  %v620 = vunpack.c.h.b16 %v586
  %v621 = vunpack.c.l.b16 %v587
  %v622 = vunpack.c.h.b16 %v587
  %v623 = vunpack.c.l.b16 %v588
  %v624 = vunpack.c.h.b16 %v588
  %v625 = vpack.c.b16 %v605, %v601
  %v626 = vpack.c.b16 %v606, %v602
  %v627 = vpack.c.b16 %v607, %v603
  %v628 = vpack.c.b16 %v608, %v604
  %v629 = vpack.c.b16 %v613, %v609
  %v630 = vpack.c.b16 %v614, %v610
  %v631 = vpack.c.b16 %v615, %v611
  %v632 = vpack.c.b16 %v616, %v612
  %v633 = vpack.c.b16 %v621, %v617
  %v634 = vpack.c.b16 %v622, %v618
  %v635 = vpack.c.b16 %v623, %v619
  %v636 = vpack.c.b16 %v624, %v620
  %649 = vmatpush.bf16.msra.mxu0 0
  %650 = vmatpush.bf16.msra.mxu0 0
  %651 = vmatpush.bf16.msra.mxu0 0
  %652 = vmatpush.bf16.msra.mxu0 0
  %653 = vmatpush.bf16.msra.mxu0 0
  %654 = vmatpush.bf16.msra.mxu0 %v633
  %655 = vmatpush.bf16.msra.mxu0 %v629
  %656 = vmatpush.bf16.msra.mxu0 %v625
  %657 = vmatmul.bf16.gmra.mxu0 %v467
  %v658 = vpop.f32.mrf.mxu0
  %v659 = vadd.f32 0.0, %v658
  %v660 = vpop.f32.mrf.mxu0
  %v661 = vadd.f32 0.0, %v660
  %662 = vmatmul.bf16.gmra.mxu0 %v470
  %v663 = vpop.f32.mrf.mxu0
  %v664 = vadd.f32 0.0, %v663
  %v665 = vpop.f32.mrf.mxu0
  %v666 = vadd.f32 0.0, %v665
  %667 = vdwg.mxu0
  %668 = vmatpush.bf16.msra.mxu0 0
  %669 = vmatpush.bf16.msra.mxu0 0
  %670 = vmatpush.bf16.msra.mxu0 0
  %671 = vmatpush.bf16.msra.mxu0 0
  %672 = vmatpush.bf16.msra.mxu0 0
  %673 = vmatpush.bf16.msra.mxu0 %v634
  %674 = vmatpush.bf16.msra.mxu0 %v630
  %675 = vmatpush.bf16.msra.mxu0 %v626
  %676 = vmatmul.bf16.gmra.mxu0 %v467
  %v677 = vpop.f32.mrf.mxu0
  %v678 = vadd.f32 0.0, %v677
  %v679 = vpop.f32.mrf.mxu0
  %v680 = vadd.f32 0.0, %v679
  %681 = vmatmul.bf16.gmra.mxu0 %v470
  %v682 = vpop.f32.mrf.mxu0
  %v683 = vadd.f32 0.0, %v682
  %v684 = vpop.f32.mrf.mxu0
  %v685 = vadd.f32 0.0, %v684
  %686 = vdwg.mxu0
  %687 = vmatpush.bf16.msra.mxu0 0
  %688 = vmatpush.bf16.msra.mxu0 0
  %689 = vmatpush.bf16.msra.mxu0 0
  %690 = vmatpush.bf16.msra.mxu0 0
  %691 = vmatpush.bf16.msra.mxu0 0
  %692 = vmatpush.bf16.msra.mxu0 %v635
  %693 = vmatpush.bf16.msra.mxu0 %v631
  %694 = vmatpush.bf16.msra.mxu0 %v627
  %695 = vmatmul.bf16.gmra.mxu0 %v467
  %v696 = vpop.f32.mrf.mxu0
  %v697 = vadd.f32 0.0, %v696
  %v698 = vpop.f32.mrf.mxu0
  %v699 = vadd.f32 0.0, %v698
  %700 = vmatmul.bf16.gmra.mxu0 %v470
  %v701 = vpop.f32.mrf.mxu0
  %v702 = vadd.f32 0.0, %v701
  %v703 = vpop.f32.mrf.mxu0
  %v704 = vadd.f32 0.0, %v703
  %705 = vdwg.mxu0
  %706 = vmatpush.bf16.msra.mxu0 0
  %707 = vmatpush.bf16.msra.mxu0 0
  %708 = vmatpush.bf16.msra.mxu0 0
  %709 = vmatpush.bf16.msra.mxu0 0
  %710 = vmatpush.bf16.msra.mxu0 0
  %711 = vmatpush.bf16.msra.mxu0 %v636
  %712 = vmatpush.bf16.msra.mxu0 %v632
  %713 = vmatpush.bf16.msra.mxu0 %v628
  %714 = vmatmul.bf16.gmra.mxu0 %v467
  %v715 = vpop.f32.mrf.mxu0
  %v716 = vadd.f32 0.0, %v715
  %v717 = vpop.f32.mrf.mxu0
  %v718 = vadd.f32 0.0, %v717
  %719 = vmatmul.bf16.gmra.mxu0 %v470
  %v720 = vpop.f32.mrf.mxu0
  %v721 = vadd.f32 0.0, %v720
  %v722 = vpop.f32.mrf.mxu0
  %v723 = vadd.f32 0.0, %v722
  %724 = vdwg.mxu0
  %v725 = vmax.f32 %v659, 0.0
  %v726 = vmax.f32 %v678, 0.0
  %v727 = vmax.f32 %v697, 0.0
  %v728 = vmax.f32 %v716, 0.0
  %v729 = vmax.f32 %v661, 0.0
  %v730 = vmax.f32 %v680, 0.0
  %v731 = vmax.f32 %v699, 0.0
  %v732 = vmax.f32 %v718, 0.0
  %v733 = vmax.f32 %v664, 0.0
  %v734 = vmax.f32 %v683, 0.0
  %v735 = vmax.f32 %v702, 0.0
  %v736 = vmax.f32 %v721, 0.0
  %v737 = vmax.f32 %v666, 0.0
  %v738 = vmax.f32 %v685, 0.0
  %v739 = vmax.f32 %v704, 0.0
  %v740 = vmax.f32 %v723, 0.0
  %v741 = vld [vmem:[%s1 + $0x4] sm:$0xf]
  %v742 = vperm.slane %v741, 0
  %v743 = vperm.slane %v741, 1
  %v744 = vperm.slane %v741, 2
  %v745 = vperm.slane %v741, 3
  %vm746 = vcmp.eq.s32.totalorder %v742, %v382
  %vm747 = vcmp.eq.s32.totalorder %v743, %v382
  %vm748 = vcmp.eq.s32.totalorder %v744, %v382
  %vm749 = vcmp.eq.s32.totalorder %v745, %v382
  %v750 = vsel %vm746, 0.00390625, 0.0
  %v751 = vsel %vm747, 0.00390625, 0.0
  %v752 = vsel %vm748, 0.00390625, 0.0
  %v753 = vsel %vm749, 0.00390625, 0.0
  %754 = vmatpush.xpose.msra.mxu0 0.0
  %755 = vmatpush.xpose.msra.mxu0 0.0
  %756 = vmatpush.xpose.msra.mxu0 0.0
  %757 = vmatpush.xpose.msra.mxu0 0.0
  %758 = vmatpush.xpose.msra.mxu0 0.0
  %759 = vmatpush.xpose.msra.mxu0 0.0
  %760 = vmatpush.xpose.msra.mxu0 0.0
  %761 = vmatpush.xpose.msra.mxu0 0.0
  %762 = vmatpush.xpose.msra.mxu0 0.0
  %763 = vmatpush.xpose.msra.mxu0 0.0
  %764 = vmatpush.xpose.msra.mxu0 0.0
  %765 = vmatpush.xpose.msra.mxu0 0.0
  %766 = vmatpush.xpose.msra.mxu0 %v737
  %767 = vmatpush.xpose.msra.mxu0 %v733
  %768 = vmatpush.xpose.msra.mxu0 %v729
  %769 = vmatpush.xpose.msra.mxu0 %v725
  %770 = vmatmul.f32.gmra.mxu0 %v750
  %v771 = vpop.f32.mrf.mxu0
  %v772 = vadd.f32 0.0, %v771
  %773 = vdwg.mxu0
  %774 = vmatpush.xpose.msra.mxu0 0.0
  %775 = vmatpush.xpose.msra.mxu0 0.0
  %776 = vmatpush.xpose.msra.mxu0 0.0
  %777 = vmatpush.xpose.msra.mxu0 0.0
  %778 = vmatpush.xpose.msra.mxu0 0.0
  %779 = vmatpush.xpose.msra.mxu0 0.0
  %780 = vmatpush.xpose.msra.mxu0 0.0
  %781 = vmatpush.xpose.msra.mxu0 0.0
  %782 = vmatpush.xpose.msra.mxu0 0.0
  %783 = vmatpush.xpose.msra.mxu0 0.0
  %784 = vmatpush.xpose.msra.mxu0 0.0
  %785 = vmatpush.xpose.msra.mxu0 0.0
  %786 = vmatpush.xpose.msra.mxu0 %v738
  %787 = vmatpush.xpose.msra.mxu0 %v734
  %788 = vmatpush.xpose.msra.mxu0 %v730
  %789 = vmatpush.xpose.msra.mxu0 %v726
  %790 = vmatmul.f32.gmra.mxu0 %v751
  %v791 = vpop.f32.mrf.mxu0
  %v792 = vadd.f32 %v772, %v791
  %793 = vdwg.mxu0
  %794 = vmatpush.xpose.msra.mxu0 0.0
  %795 = vmatpush.xpose.msra.mxu0 0.0
  %796 = vmatpush.xpose.msra.mxu0 0.0
  %797 = vmatpush.xpose.msra.mxu0 0.0
  %798 = vmatpush.xpose.msra.mxu0 0.0
  %799 = vmatpush.xpose.msra.mxu0 0.0
  %800 = vmatpush.xpose.msra.mxu0 0.0
  %801 = vmatpush.xpose.msra.mxu0 0.0
  %802 = vmatpush.xpose.msra.mxu0 0.0
  %803 = vmatpush.xpose.msra.mxu0 0.0
  %804 = vmatpush.xpose.msra.mxu0 0.0
  %805 = vmatpush.xpose.msra.mxu0 0.0
  %806 = vmatpush.xpose.msra.mxu0 %v739
  %807 = vmatpush.xpose.msra.mxu0 %v735
  %808 = vmatpush.xpose.msra.mxu0 %v731
  %809 = vmatpush.xpose.msra.mxu0 %v727
  %810 = vmatmul.f32.gmra.mxu0 %v752
  %v811 = vpop.f32.mrf.mxu0
  %v812 = vadd.f32 %v792, %v811
  %813 = vdwg.mxu0
  %814 = vmatpush.xpose.msra.mxu0 0.0
  %815 = vmatpush.xpose.msra.mxu0 0.0
  %816 = vmatpush.xpose.msra.mxu0 0.0
  %817 = vmatpush.xpose.msra.mxu0 0.0
  %818 = vmatpush.xpose.msra.mxu0 0.0
  %819 = vmatpush.xpose.msra.mxu0 0.0
  %820 = vmatpush.xpose.msra.mxu0 0.0
  %821 = vmatpush.xpose.msra.mxu0 0.0
  %822 = vmatpush.xpose.msra.mxu0 0.0
  %823 = vmatpush.xpose.msra.mxu0 0.0
  %824 = vmatpush.xpose.msra.mxu0 0.0
  %825 = vmatpush.xpose.msra.mxu0 0.0
  %826 = vmatpush.xpose.msra.mxu0 %v740
  %827 = vmatpush.xpose.msra.mxu0 %v736
  %828 = vmatpush.xpose.msra.mxu0 %v732
  %829 = vmatpush.xpose.msra.mxu0 %v728
  %830 = vmatmul.f32.gmra.mxu0 %v753
  %v831 = vpop.f32.mrf.mxu0
  %v832 = vadd.f32 %v812, %v831
  %833 = vdwg.mxu0
  %834 = vmatpush.xpose.msra.mxu0 0.0
  %835 = vmatpush.xpose.msra.mxu0 0.0
  %836 = vmatpush.xpose.msra.mxu0 0.0
  %837 = vmatpush.xpose.msra.mxu0 0.0
  %838 = vmatpush.xpose.msra.mxu0 0.0
  %839 = vmatpush.xpose.msra.mxu0 0.0
  %840 = vmatpush.xpose.msra.mxu0 0.0
  %841 = vmatpush.xpose.msra.mxu0 0.0
  %842 = vmatpush.xpose.msra.mxu0 0.0
  %843 = vmatpush.xpose.msra.mxu0 0.0
  %844 = vmatpush.xpose.msra.mxu0 0.0
  %845 = vmatpush.xpose.msra.mxu0 0.0
  %846 = vmatpush.xpose.msra.mxu0 %v560
  %847 = vmatpush.xpose.msra.mxu0 %v556
  %848 = vmatpush.xpose.msra.mxu0 %v552
  %849 = vmatpush.xpose.msra.mxu0 %v548
  %850 = vmatmul.f32.gmra.mxu0 %v573
  %v851 = vpop.f32.mrf.mxu0
  %v852 = vadd.f32 %v832, %v851
  %853 = vdwg.mxu0
  %854 = vmatpush.xpose.msra.mxu0 0.0
  %855 = vmatpush.xpose.msra.mxu0 0.0
  %856 = vmatpush.xpose.msra.mxu0 0.0
  %857 = vmatpush.xpose.msra.mxu0 0.0
  %858 = vmatpush.xpose.msra.mxu0 0.0
  %859 = vmatpush.xpose.msra.mxu0 0.0
  %860 = vmatpush.xpose.msra.mxu0 0.0
  %861 = vmatpush.xpose.msra.mxu0 0.0
  %862 = vmatpush.xpose.msra.mxu0 0.0
  %863 = vmatpush.xpose.msra.mxu0 0.0
  %864 = vmatpush.xpose.msra.mxu0 0.0
  %865 = vmatpush.xpose.msra.mxu0 0.0
  %866 = vmatpush.xpose.msra.mxu0 %v561
  %867 = vmatpush.xpose.msra.mxu0 %v557
  %868 = vmatpush.xpose.msra.mxu0 %v553
  %869 = vmatpush.xpose.msra.mxu0 %v549
  %870 = vmatmul.f32.gmra.mxu0 %v574
  %v871 = vpop.f32.mrf.mxu0
  %v872 = vadd.f32 %v852, %v871
  %873 = vdwg.mxu0
  %874 = vmatpush.xpose.msra.mxu0 0.0
  %875 = vmatpush.xpose.msra.mxu0 0.0
  %876 = vmatpush.xpose.msra.mxu0 0.0
  %877 = vmatpush.xpose.msra.mxu0 0.0
  %878 = vmatpush.xpose.msra.mxu0 0.0
  %879 = vmatpush.xpose.msra.mxu0 0.0
  %880 = vmatpush.xpose.msra.mxu0 0.0
  %881 = vmatpush.xpose.msra.mxu0 0.0
  %882 = vmatpush.xpose.msra.mxu0 0.0
  %883 = vmatpush.xpose.msra.mxu0 0.0
  %884 = vmatpush.xpose.msra.mxu0 0.0
  %885 = vmatpush.xpose.msra.mxu0 0.0
  %886 = vmatpush.xpose.msra.mxu0 %v562
  %887 = vmatpush.xpose.msra.mxu0 %v558
  %888 = vmatpush.xpose.msra.mxu0 %v554
  %889 = vmatpush.xpose.msra.mxu0 %v550
  %890 = vmatmul.f32.gmra.mxu0 %v575
  %v891 = vpop.f32.mrf.mxu0
  %v892 = vadd.f32 %v872, %v891
  %893 = vdwg.mxu0
  %894 = vmatpush.xpose.msra.mxu0 0.0
  %895 = vmatpush.xpose.msra.mxu0 0.0
  %896 = vmatpush.xpose.msra.mxu0 0.0
  %897 = vmatpush.xpose.msra.mxu0 0.0
  %898 = vmatpush.xpose.msra.mxu0 0.0
  %899 = vmatpush.xpose.msra.mxu0 0.0
  %900 = vmatpush.xpose.msra.mxu0 0.0
  %901 = vmatpush.xpose.msra.mxu0 0.0
  %902 = vmatpush.xpose.msra.mxu0 0.0
  %903 = vmatpush.xpose.msra.mxu0 0.0
  %904 = vmatpush.xpose.msra.mxu0 0.0
  %905 = vmatpush.xpose.msra.mxu0 0.0
  %906 = vmatpush.xpose.msra.mxu0 %v563
  %907 = vmatpush.xpose.msra.mxu0 %v559
  %908 = vmatpush.xpose.msra.mxu0 %v555
  %909 = vmatpush.xpose.msra.mxu0 %v551
  %910 = vmatmul.f32.gmra.mxu0 %v576
  %v911 = vpop.f32.mrf.mxu0
  %v912 = vadd.f32 %v892, %v911
  %913 = vdwg.mxu0
  %v914 = vld [vmem:[#allocation2 + $0x20] sm:$0xff]
  %v915 = vld [vmem:[#allocation2 + $0x28] sm:$0xff]
  %v916 = vld [vmem:[#allocation2 + $0x70] sm:$0xff]
  %v917 = vld [vmem:[#allocation2 + $0x78] sm:$0xff]
  %v918 = vld [vmem:[#allocation2 + $0xc0] sm:$0xff]
  %v919 = vld [vmem:[#allocation2 + $0xc8] sm:$0xff]
  %v920 = vld [vmem:[#allocation2 + $0x110] sm:$0xff]
  %v921 = vld [vmem:[#allocation2 + $0x118] sm:$0xff]
  %v922 = vld [vmem:[#allocation2 + $0x160] sm:$0xff]
  %v923 = vld [vmem:[#allocation2 + $0x168] sm:$0xff]
  %v924 = vld [vmem:[#allocation2 + $0x1b0] sm:$0xff]
  %v925 = vld [vmem:[#allocation2 + $0x1b8] sm:$0xff]
  %v938 = vunpack.c.l.b16 %v914
  %v939 = vunpack.c.h.b16 %v914
  %v940 = vunpack.c.l.b16 %v915
  %v941 = vunpack.c.h.b16 %v915
  %v942 = vunpack.c.l.b16 %v916
  %v943 = vunpack.c.h.b16 %v916
  %v944 = vunpack.c.l.b16 %v917
  %v945 = vunpack.c.h.b16 %v917
  %v946 = vunpack.c.l.b16 %v918
  %v947 = vunpack.c.h.b16 %v918
  %v948 = vunpack.c.l.b16 %v919
  %v949 = vunpack.c.h.b16 %v919
  %v950 = vunpack.c.l.b16 %v920
  %v951 = vunpack.c.h.b16 %v920
  %v952 = vunpack.c.l.b16 %v921
  %v953 = vunpack.c.h.b16 %v921
  %v954 = vunpack.c.l.b16 %v922
  %v955 = vunpack.c.h.b16 %v922
  %v956 = vunpack.c.l.b16 %v923
  %v957 = vunpack.c.h.b16 %v923
  %v958 = vunpack.c.l.b16 %v924
  %v959 = vunpack.c.h.b16 %v924
  %v960 = vunpack.c.l.b16 %v925
  %v961 = vunpack.c.h.b16 %v925
  %v962 = vpack.c.b16 %v942, %v938
  %v963 = vpack.c.b16 %v943, %v939
  %v964 = vpack.c.b16 %v944, %v940
  %v965 = vpack.c.b16 %v945, %v941
  %v966 = vpack.c.b16 %v950, %v946
  %v967 = vpack.c.b16 %v951, %v947
  %v968 = vpack.c.b16 %v952, %v948
  %v969 = vpack.c.b16 %v953, %v949
  %v970 = vpack.c.b16 %v958, %v954
  %v971 = vpack.c.b16 %v959, %v955
  %v972 = vpack.c.b16 %v960, %v956
  %v973 = vpack.c.b16 %v961, %v957
  %986 = vmatpush.bf16.msra.mxu0 0
  %987 = vmatpush.bf16.msra.mxu0 0
  %988 = vmatpush.bf16.msra.mxu0 0
  %989 = vmatpush.bf16.msra.mxu0 0
  %990 = vmatpush.bf16.msra.mxu0 0
  %991 = vmatpush.bf16.msra.mxu0 %v970
  %992 = vmatpush.bf16.msra.mxu0 %v966
  %993 = vmatpush.bf16.msra.mxu0 %v962
  %994 = vmatmul.bf16.gmra.mxu0 %v467
  %v995 = vpop.f32.mrf.mxu0
  %v996 = vadd.f32 0.0, %v995
  %v997 = vpop.f32.mrf.mxu0
  %v998 = vadd.f32 0.0, %v997
  %999 = vmatmul.bf16.gmra.mxu0 %v470
  %v1000 = vpop.f32.mrf.mxu0
  %v1001 = vadd.f32 0.0, %v1000
  %v1002 = vpop.f32.mrf.mxu0
  %v1003 = vadd.f32 0.0, %v1002
  %1004 = vdwg.mxu0
  %1005 = vmatpush.bf16.msra.mxu0 0
  %1006 = vmatpush.bf16.msra.mxu0 0
  %1007 = vmatpush.bf16.msra.mxu0 0
  %1008 = vmatpush.bf16.msra.mxu0 0
  %1009 = vmatpush.bf16.msra.mxu0 0
  %1010 = vmatpush.bf16.msra.mxu0 %v971
  %1011 = vmatpush.bf16.msra.mxu0 %v967
  %1012 = vmatpush.bf16.msra.mxu0 %v963
  %1013 = vmatmul.bf16.gmra.mxu0 %v467
  %v1014 = vpop.f32.mrf.mxu0
  %v1015 = vadd.f32 0.0, %v1014
  %v1016 = vpop.f32.mrf.mxu0
  %v1017 = vadd.f32 0.0, %v1016
  %1018 = vmatmul.bf16.gmra.mxu0 %v470
  %v1019 = vpop.f32.mrf.mxu0
  %v1020 = vadd.f32 0.0, %v1019
  %v1021 = vpop.f32.mrf.mxu0
  %v1022 = vadd.f32 0.0, %v1021
  %1023 = vdwg.mxu0
  %1024 = vmatpush.bf16.msra.mxu0 0
  %1025 = vmatpush.bf16.msra.mxu0 0
  %1026 = vmatpush.bf16.msra.mxu0 0
  %1027 = vmatpush.bf16.msra.mxu0 0
  %1028 = vmatpush.bf16.msra.mxu0 0
  %1029 = vmatpush.bf16.msra.mxu0 %v972
  %1030 = vmatpush.bf16.msra.mxu0 %v968
  %1031 = vmatpush.bf16.msra.mxu0 %v964
  %1032 = vmatmul.bf16.gmra.mxu0 %v467
  %v1033 = vpop.f32.mrf.mxu0
  %v1034 = vadd.f32 0.0, %v1033
  %v1035 = vpop.f32.mrf.mxu0
  %v1036 = vadd.f32 0.0, %v1035
  %1037 = vmatmul.bf16.gmra.mxu0 %v470
  %v1038 = vpop.f32.mrf.mxu0
  %v1039 = vadd.f32 0.0, %v1038
  %v1040 = vpop.f32.mrf.mxu0
  %v1041 = vadd.f32 0.0, %v1040
  %1042 = vdwg.mxu0
  %1043 = vmatpush.bf16.msra.mxu0 0
  %1044 = vmatpush.bf16.msra.mxu0 0
  %1045 = vmatpush.bf16.msra.mxu0 0
  %1046 = vmatpush.bf16.msra.mxu0 0
  %1047 = vmatpush.bf16.msra.mxu0 0
  %1048 = vmatpush.bf16.msra.mxu0 %v973
  %1049 = vmatpush.bf16.msra.mxu0 %v969
  %1050 = vmatpush.bf16.msra.mxu0 %v965
  %1051 = vmatmul.bf16.gmra.mxu0 %v467
  %v1052 = vpop.f32.mrf.mxu0
  %v1053 = vadd.f32 0.0, %v1052
  %v1054 = vpop.f32.mrf.mxu0
  %v1055 = vadd.f32 0.0, %v1054
  %1056 = vmatmul.bf16.gmra.mxu0 %v470
  %v1057 = vpop.f32.mrf.mxu0
  %v1058 = vadd.f32 0.0, %v1057
  %v1059 = vpop.f32.mrf.mxu0
  %v1060 = vadd.f32 0.0, %v1059
  %1061 = vdwg.mxu0
  %v1062 = vmax.f32 %v996, 0.0
  %v1063 = vmax.f32 %v1015, 0.0
  %v1064 = vmax.f32 %v1034, 0.0
  %v1065 = vmax.f32 %v1053, 0.0
  %v1066 = vmax.f32 %v998, 0.0
  %v1067 = vmax.f32 %v1017, 0.0
  %v1068 = vmax.f32 %v1036, 0.0
  %v1069 = vmax.f32 %v1055, 0.0
  %v1070 = vmax.f32 %v1001, 0.0
  %v1071 = vmax.f32 %v1020, 0.0
  %v1072 = vmax.f32 %v1039, 0.0
  %v1073 = vmax.f32 %v1058, 0.0
  %v1074 = vmax.f32 %v1003, 0.0
  %v1075 = vmax.f32 %v1022, 0.0
  %v1076 = vmax.f32 %v1041, 0.0
  %v1077 = vmax.f32 %v1060, 0.0
  %v1078 = vld [vmem:[%s1 + $0x8] sm:$0xf]
  %v1079 = vperm.slane %v1078, 0
  %v1080 = vperm.slane %v1078, 1
  %v1081 = vperm.slane %v1078, 2
  %v1082 = vperm.slane %v1078, 3
  %vm1083 = vcmp.eq.s32.totalorder %v1079, %v382
  %vm1084 = vcmp.eq.s32.totalorder %v1080, %v382
  %vm1085 = vcmp.eq.s32.totalorder %v1081, %v382
  %vm1086 = vcmp.eq.s32.totalorder %v1082, %v382
  %v1087 = vsel %vm1083, 0.00390625, 0.0
  %v1088 = vsel %vm1084, 0.00390625, 0.0
  %v1089 = vsel %vm1085, 0.00390625, 0.0
  %v1090 = vsel %vm1086, 0.00390625, 0.0
  %1091 = vmatpush.xpose.msra.mxu0 0.0
  %1092 = vmatpush.xpose.msra.mxu0 0.0
  %1093 = vmatpush.xpose.msra.mxu0 0.0
  %1094 = vmatpush.xpose.msra.mxu0 0.0
  %1095 = vmatpush.xpose.msra.mxu0 0.0
  %1096 = vmatpush.xpose.msra.mxu0 0.0
  %1097 = vmatpush.xpose.msra.mxu0 0.0
  %1098 = vmatpush.xpose.msra.mxu0 0.0
  %1099 = vmatpush.xpose.msra.mxu0 0.0
  %1100 = vmatpush.xpose.msra.mxu0 0.0
  %1101 = vmatpush.xpose.msra.mxu0 0.0
  %1102 = vmatpush.xpose.msra.mxu0 0.0
  %1103 = vmatpush.xpose.msra.mxu0 %v1074
  %1104 = vmatpush.xpose.msra.mxu0 %v1070
  %1105 = vmatpush.xpose.msra.mxu0 %v1066
  %1106 = vmatpush.xpose.msra.mxu0 %v1062
  %1107 = vmatmul.f32.gmra.mxu0 %v1087
  %v1108 = vpop.f32.mrf.mxu0
  %v1109 = vadd.f32 0.0, %v1108
  %1110 = vdwg.mxu0
  %1111 = vmatpush.xpose.msra.mxu0 0.0
  %1112 = vmatpush.xpose.msra.mxu0 0.0
  %1113 = vmatpush.xpose.msra.mxu0 0.0
  %1114 = vmatpush.xpose.msra.mxu0 0.0
  %1115 = vmatpush.xpose.msra.mxu0 0.0
  %1116 = vmatpush.xpose.msra.mxu0 0.0
  %1117 = vmatpush.xpose.msra.mxu0 0.0
  %1118 = vmatpush.xpose.msra.mxu0 0.0
  %1119 = vmatpush.xpose.msra.mxu0 0.0
  %1120 = vmatpush.xpose.msra.mxu0 0.0
  %1121 = vmatpush.xpose.msra.mxu0 0.0
  %1122 = vmatpush.xpose.msra.mxu0 0.0
  %1123 = vmatpush.xpose.msra.mxu0 %v1075
  %1124 = vmatpush.xpose.msra.mxu0 %v1071
  %1125 = vmatpush.xpose.msra.mxu0 %v1067
  %1126 = vmatpush.xpose.msra.mxu0 %v1063
  %1127 = vmatmul.f32.gmra.mxu0 %v1088
  %v1128 = vpop.f32.mrf.mxu0
  %v1129 = vadd.f32 %v1109, %v1128
  %1130 = vdwg.mxu0
  %1131 = vmatpush.xpose.msra.mxu0 0.0
  %1132 = vmatpush.xpose.msra.mxu0 0.0
  %1133 = vmatpush.xpose.msra.mxu0 0.0
  %1134 = vmatpush.xpose.msra.mxu0 0.0
  %1135 = vmatpush.xpose.msra.mxu0 0.0
  %1136 = vmatpush.xpose.msra.mxu0 0.0
  %1137 = vmatpush.xpose.msra.mxu0 0.0
  %1138 = vmatpush.xpose.msra.mxu0 0.0
  %1139 = vmatpush.xpose.msra.mxu0 0.0
  %1140 = vmatpush.xpose.msra.mxu0 0.0
  %1141 = vmatpush.xpose.msra.mxu0 0.0
  %1142 = vmatpush.xpose.msra.mxu0 0.0
  %1143 = vmatpush.xpose.msra.mxu0 %v1076
  %1144 = vmatpush.xpose.msra.mxu0 %v1072
  %1145 = vmatpush.xpose.msra.mxu0 %v1068
  %1146 = vmatpush.xpose.msra.mxu0 %v1064
  %1147 = vmatmul.f32.gmra.mxu0 %v1089
  %v1148 = vpop.f32.mrf.mxu0
  %v1149 = vadd.f32 %v1129, %v1148
  %1150 = vdwg.mxu0
  %1151 = vmatpush.xpose.msra.mxu0 0.0
  %1152 = vmatpush.xpose.msra.mxu0 0.0
  %1153 = vmatpush.xpose.msra.mxu0 0.0
  %1154 = vmatpush.xpose.msra.mxu0 0.0
  %1155 = vmatpush.xpose.msra.mxu0 0.0
  %1156 = vmatpush.xpose.msra.mxu0 0.0
  %1157 = vmatpush.xpose.msra.mxu0 0.0
  %1158 = vmatpush.xpose.msra.mxu0 0.0
  %1159 = vmatpush.xpose.msra.mxu0 0.0
  %1160 = vmatpush.xpose.msra.mxu0 0.0
  %1161 = vmatpush.xpose.msra.mxu0 0.0
  %1162 = vmatpush.xpose.msra.mxu0 0.0
  %1163 = vmatpush.xpose.msra.mxu0 %v1077
  %1164 = vmatpush.xpose.msra.mxu0 %v1073
  %1165 = vmatpush.xpose.msra.mxu0 %v1069
  %1166 = vmatpush.xpose.msra.mxu0 %v1065
  %1167 = vmatmul.f32.gmra.mxu0 %v1090
  %v1168 = vpop.f32.mrf.mxu0
  %v1169 = vadd.f32 %v1149, %v1168
  %1170 = vdwg.mxu0
  %v1171 = vadd.f32 %v912, %v1169
  %v1172 = vld [vmem:[#allocation2 + $0x30] sm:$0xff]
  %v1173 = vld [vmem:[#allocation2 + $0x38] sm:$0xff]
  %v1174 = vld [vmem:[#allocation2 + $0x80] sm:$0xff]
  %v1175 = vld [vmem:[#allocation2 + $0x88] sm:$0xff]
  %v1176 = vld [vmem:[#allocation2 + $0xd0] sm:$0xff]
  %v1177 = vld [vmem:[#allocation2 + $0xd8] sm:$0xff]
  %v1178 = vld [vmem:[#allocation2 + $0x120] sm:$0xff]
  %v1179 = vld [vmem:[#allocation2 + $0x128] sm:$0xff]
  %v1180 = vld [vmem:[#allocation2 + $0x170] sm:$0xff]
  %v1181 = vld [vmem:[#allocation2 + $0x178] sm:$0xff]
  %v1182 = vld [vmem:[#allocation2 + $0x1c0] sm:$0xff]
  %v1183 = vld [vmem:[#allocation2 + $0x1c8] sm:$0xff]
  %v1196 = vunpack.c.l.b16 %v1172
  %v1197 = vunpack.c.h.b16 %v1172
  %v1198 = vunpack.c.l.b16 %v1173
  %v1199 = vunpack.c.h.b16 %v1173
  %v1200 = vunpack.c.l.b16 %v1174
  %v1201 = vunpack.c.h.b16 %v1174
  %v1202 = vunpack.c.l.b16 %v1175
  %v1203 = vunpack.c.h.b16 %v1175
  %v1204 = vunpack.c.l.b16 %v1176
  %v1205 = vunpack.c.h.b16 %v1176
  %v1206 = vunpack.c.l.b16 %v1177
  %v1207 = vunpack.c.h.b16 %v1177
  %v1208 = vunpack.c.l.b16 %v1178
  %v1209 = vunpack.c.h.b16 %v1178
  %v1210 = vunpack.c.l.b16 %v1179
  %v1211 = vunpack.c.h.b16 %v1179
  %v1212 = vunpack.c.l.b16 %v1180
  %v1213 = vunpack.c.h.b16 %v1180
  %v1214 = vunpack.c.l.b16 %v1181
  %v1215 = vunpack.c.h.b16 %v1181
  %v1216 = vunpack.c.l.b16 %v1182
  %v1217 = vunpack.c.h.b16 %v1182
  %v1218 = vunpack.c.l.b16 %v1183
  %v1219 = vunpack.c.h.b16 %v1183
  %v1220 = vpack.c.b16 %v1200, %v1196
  %v1221 = vpack.c.b16 %v1201, %v1197
  %v1222 = vpack.c.b16 %v1202, %v1198
  %v1223 = vpack.c.b16 %v1203, %v1199
  %v1224 = vpack.c.b16 %v1208, %v1204
  %v1225 = vpack.c.b16 %v1209, %v1205
  %v1226 = vpack.c.b16 %v1210, %v1206
  %v1227 = vpack.c.b16 %v1211, %v1207
  %v1228 = vpack.c.b16 %v1216, %v1212
  %v1229 = vpack.c.b16 %v1217, %v1213
  %v1230 = vpack.c.b16 %v1218, %v1214
  %v1231 = vpack.c.b16 %v1219, %v1215
  %1244 = vmatpush.bf16.msra.mxu0 0
  %1245 = vmatpush.bf16.msra.mxu0 0
  %1246 = vmatpush.bf16.msra.mxu0 0
  %1247 = vmatpush.bf16.msra.mxu0 0
  %1248 = vmatpush.bf16.msra.mxu0 0
  %1249 = vmatpush.bf16.msra.mxu0 %v1228
  %1250 = vmatpush.bf16.msra.mxu0 %v1224
  %1251 = vmatpush.bf16.msra.mxu0 %v1220
  %1252 = vmatmul.bf16.gmra.mxu0 %v467
  %v1253 = vpop.f32.mrf.mxu0
  %v1254 = vadd.f32 0.0, %v1253
  %v1255 = vpop.f32.mrf.mxu0
  %v1256 = vadd.f32 0.0, %v1255
  %1257 = vmatmul.bf16.gmra.mxu0 %v470
  %v1258 = vpop.f32.mrf.mxu0
  %v1259 = vadd.f32 0.0, %v1258
  %v1260 = vpop.f32.mrf.mxu0
  %v1261 = vadd.f32 0.0, %v1260
  %1262 = vdwg.mxu0
  %1263 = vmatpush.bf16.msra.mxu0 0
  %1264 = vmatpush.bf16.msra.mxu0 0
  %1265 = vmatpush.bf16.msra.mxu0 0
  %1266 = vmatpush.bf16.msra.mxu0 0
  %1267 = vmatpush.bf16.msra.mxu0 0
  %1268 = vmatpush.bf16.msra.mxu0 %v1229
  %1269 = vmatpush.bf16.msra.mxu0 %v1225
  %1270 = vmatpush.bf16.msra.mxu0 %v1221
  %1271 = vmatmul.bf16.gmra.mxu0 %v467
  %v1272 = vpop.f32.mrf.mxu0
  %v1273 = vadd.f32 0.0, %v1272
  %v1274 = vpop.f32.mrf.mxu0
  %v1275 = vadd.f32 0.0, %v1274
  %1276 = vmatmul.bf16.gmra.mxu0 %v470
  %v1277 = vpop.f32.mrf.mxu0
  %v1278 = vadd.f32 0.0, %v1277
  %v1279 = vpop.f32.mrf.mxu0
  %v1280 = vadd.f32 0.0, %v1279
  %1281 = vdwg.mxu0
  %1282 = vmatpush.bf16.msra.mxu0 0
  %1283 = vmatpush.bf16.msra.mxu0 0
  %1284 = vmatpush.bf16.msra.mxu0 0
  %1285 = vmatpush.bf16.msra.mxu0 0
  %1286 = vmatpush.bf16.msra.mxu0 0
  %1287 = vmatpush.bf16.msra.mxu0 %v1230
  %1288 = vmatpush.bf16.msra.mxu0 %v1226
  %1289 = vmatpush.bf16.msra.mxu0 %v1222
  %1290 = vmatmul.bf16.gmra.mxu0 %v467
  %v1291 = vpop.f32.mrf.mxu0
  %v1292 = vadd.f32 0.0, %v1291
  %v1293 = vpop.f32.mrf.mxu0
  %v1294 = vadd.f32 0.0, %v1293
  %1295 = vmatmul.bf16.gmra.mxu0 %v470
  %v1296 = vpop.f32.mrf.mxu0
  %v1297 = vadd.f32 0.0, %v1296
  %v1298 = vpop.f32.mrf.mxu0
  %v1299 = vadd.f32 0.0, %v1298
  %1300 = vdwg.mxu0
  %1301 = vmatpush.bf16.msra.mxu0 0
  %1302 = vmatpush.bf16.msra.mxu0 0
  %1303 = vmatpush.bf16.msra.mxu0 0
  %1304 = vmatpush.bf16.msra.mxu0 0
  %1305 = vmatpush.bf16.msra.mxu0 0
  %1306 = vmatpush.bf16.msra.mxu0 %v1231
  %1307 = vmatpush.bf16.msra.mxu0 %v1227
  %1308 = vmatpush.bf16.msra.mxu0 %v1223
  %1309 = vmatmul.bf16.gmra.mxu0 %v467
  %v1310 = vpop.f32.mrf.mxu0
  %v1311 = vadd.f32 0.0, %v1310
  %v1312 = vpop.f32.mrf.mxu0
  %v1313 = vadd.f32 0.0, %v1312
  %1314 = vmatmul.bf16.gmra.mxu0 %v470
  %v1315 = vpop.f32.mrf.mxu0
  %v1316 = vadd.f32 0.0, %v1315
  %v1317 = vpop.f32.mrf.mxu0
  %v1318 = vadd.f32 0.0, %v1317
  %1319 = vdwg.mxu0
  %v1320 = vmax.f32 %v1254, 0.0
  %v1321 = vmax.f32 %v1273, 0.0
  %v1322 = vmax.f32 %v1292, 0.0
  %v1323 = vmax.f32 %v1311, 0.0
  %v1324 = vmax.f32 %v1256, 0.0
  %v1325 = vmax.f32 %v1275, 0.0
  %v1326 = vmax.f32 %v1294, 0.0
  %v1327 = vmax.f32 %v1313, 0.0
  %v1328 = vmax.f32 %v1259, 0.0
  %v1329 = vmax.f32 %v1278, 0.0
  %v1330 = vmax.f32 %v1297, 0.0
  %v1331 = vmax.f32 %v1316, 0.0
  %v1332 = vmax.f32 %v1261, 0.0
  %v1333 = vmax.f32 %v1280, 0.0
  %v1334 = vmax.f32 %v1299, 0.0
  %v1335 = vmax.f32 %v1318, 0.0
  %v1336 = vld [vmem:[%s1 + $0xc] sm:$0xf]
  %v1337 = vperm.slane %v1336, 0
  %v1338 = vperm.slane %v1336, 1
  %v1339 = vperm.slane %v1336, 2
  %v1340 = vperm.slane %v1336, 3
  %vm1341 = vcmp.eq.s32.totalorder %v1337, %v382
  %vm1342 = vcmp.eq.s32.totalorder %v1338, %v382
  %vm1343 = vcmp.eq.s32.totalorder %v1339, %v382
  %vm1344 = vcmp.eq.s32.totalorder %v1340, %v382
  %v1345 = vsel %vm1341, 0.00390625, 0.0
  %v1346 = vsel %vm1342, 0.00390625, 0.0
  %v1347 = vsel %vm1343, 0.00390625, 0.0
  %v1348 = vsel %vm1344, 0.00390625, 0.0
  %1349 = vmatpush.xpose.msra.mxu0 0.0
  %1350 = vmatpush.xpose.msra.mxu0 0.0
  %1351 = vmatpush.xpose.msra.mxu0 0.0
  %1352 = vmatpush.xpose.msra.mxu0 0.0
  %1353 = vmatpush.xpose.msra.mxu0 0.0
  %1354 = vmatpush.xpose.msra.mxu0 0.0
  %1355 = vmatpush.xpose.msra.mxu0 0.0
  %1356 = vmatpush.xpose.msra.mxu0 0.0
  %1357 = vmatpush.xpose.msra.mxu0 0.0
  %1358 = vmatpush.xpose.msra.mxu0 0.0
  %1359 = vmatpush.xpose.msra.mxu0 0.0
  %1360 = vmatpush.xpose.msra.mxu0 0.0
  %1361 = vmatpush.xpose.msra.mxu0 %v1332
  %1362 = vmatpush.xpose.msra.mxu0 %v1328
  %1363 = vmatpush.xpose.msra.mxu0 %v1324
  %1364 = vmatpush.xpose.msra.mxu0 %v1320
  %1365 = vmatmul.f32.gmra.mxu0 %v1345
  %v1366 = vpop.f32.mrf.mxu0
  %v1367 = vadd.f32 0.0, %v1366
  %1368 = vdwg.mxu0
  %1369 = vmatpush.xpose.msra.mxu0 0.0
  %1370 = vmatpush.xpose.msra.mxu0 0.0
  %1371 = vmatpush.xpose.msra.mxu0 0.0
  %1372 = vmatpush.xpose.msra.mxu0 0.0
  %1373 = vmatpush.xpose.msra.mxu0 0.0
  %1374 = vmatpush.xpose.msra.mxu0 0.0
  %1375 = vmatpush.xpose.msra.mxu0 0.0
  %1376 = vmatpush.xpose.msra.mxu0 0.0
  %1377 = vmatpush.xpose.msra.mxu0 0.0
  %1378 = vmatpush.xpose.msra.mxu0 0.0
  %1379 = vmatpush.xpose.msra.mxu0 0.0
  %1380 = vmatpush.xpose.msra.mxu0 0.0
  %1381 = vmatpush.xpose.msra.mxu0 %v1333
  %1382 = vmatpush.xpose.msra.mxu0 %v1329
  %1383 = vmatpush.xpose.msra.mxu0 %v1325
  %1384 = vmatpush.xpose.msra.mxu0 %v1321
  %1385 = vmatmul.f32.gmra.mxu0 %v1346
  %v1386 = vpop.f32.mrf.mxu0
  %v1387 = vadd.f32 %v1367, %v1386
  %1388 = vdwg.mxu0
  %1389 = vmatpush.xpose.msra.mxu0 0.0
  %1390 = vmatpush.xpose.msra.mxu0 0.0
  %1391 = vmatpush.xpose.msra.mxu0 0.0
  %1392 = vmatpush.xpose.msra.mxu0 0.0
  %1393 = vmatpush.xpose.msra.mxu0 0.0
  %1394 = vmatpush.xpose.msra.mxu0 0.0
  %1395 = vmatpush.xpose.msra.mxu0 0.0
  %1396 = vmatpush.xpose.msra.mxu0 0.0
  %1397 = vmatpush.xpose.msra.mxu0 0.0
  %1398 = vmatpush.xpose.msra.mxu0 0.0
  %1399 = vmatpush.xpose.msra.mxu0 0.0
  %1400 = vmatpush.xpose.msra.mxu0 0.0
  %1401 = vmatpush.xpose.msra.mxu0 %v1334
  %1402 = vmatpush.xpose.msra.mxu0 %v1330
  %1403 = vmatpush.xpose.msra.mxu0 %v1326
  %1404 = vmatpush.xpose.msra.mxu0 %v1322
  %1405 = vmatmul.f32.gmra.mxu0 %v1347
  %v1406 = vpop.f32.mrf.mxu0
  %v1407 = vadd.f32 %v1387, %v1406
  %1408 = vdwg.mxu0
  %1409 = vmatpush.xpose.msra.mxu0 0.0
  %1410 = vmatpush.xpose.msra.mxu0 0.0
  %1411 = vmatpush.xpose.msra.mxu0 0.0
  %1412 = vmatpush.xpose.msra.mxu0 0.0
  %1413 = vmatpush.xpose.msra.mxu0 0.0
  %1414 = vmatpush.xpose.msra.mxu0 0.0
  %1415 = vmatpush.xpose.msra.mxu0 0.0
  %1416 = vmatpush.xpose.msra.mxu0 0.0
  %1417 = vmatpush.xpose.msra.mxu0 0.0
  %1418 = vmatpush.xpose.msra.mxu0 0.0
  %1419 = vmatpush.xpose.msra.mxu0 0.0
  %1420 = vmatpush.xpose.msra.mxu0 0.0
  %1421 = vmatpush.xpose.msra.mxu0 %v1335
  %1422 = vmatpush.xpose.msra.mxu0 %v1331
  %1423 = vmatpush.xpose.msra.mxu0 %v1327
  %1424 = vmatpush.xpose.msra.mxu0 %v1323
  %1425 = vmatmul.f32.gmra.mxu0 %v1348
  %v1426 = vpop.f32.mrf.mxu0
  %v1427 = vadd.f32 %v1407, %v1426
  %1428 = vdwg.mxu0
  %v1429 = vadd.f32 %v1171, %v1427
  %v1430 = vld [vmem:[#allocation2 + $0x40] sm:$0xff]
  %v1431 = vld [vmem:[#allocation2 + $0x48] sm:$0xff]
  %v1432 = vld [vmem:[#allocation2 + $0x90] sm:$0xff]
  %v1433 = vld [vmem:[#allocation2 + $0x98] sm:$0xff]
  %v1434 = vld [vmem:[#allocation2 + $0xe0] sm:$0xff]
  %v1435 = vld [vmem:[#allocation2 + $0xe8] sm:$0xff]
  %v1436 = vld [vmem:[#allocation2 + $0x130] sm:$0xff]
  %v1437 = vld [vmem:[#allocation2 + $0x138] sm:$0xff]
  %v1438 = vld [vmem:[#allocation2 + $0x180] sm:$0xff]
  %v1439 = vld [vmem:[#allocation2 + $0x188] sm:$0xff]
  %v1440 = vld [vmem:[#allocation2 + $0x1d0] sm:$0xff]
  %v1441 = vld [vmem:[#allocation2 + $0x1d8] sm:$0xff]
  %v1454 = vunpack.c.l.b16 %v1430
  %v1455 = vunpack.c.h.b16 %v1430
  %v1456 = vunpack.c.l.b16 %v1431
  %v1457 = vunpack.c.h.b16 %v1431
  %v1458 = vunpack.c.l.b16 %v1432
  %v1459 = vunpack.c.h.b16 %v1432
  %v1460 = vunpack.c.l.b16 %v1433
  %v1461 = vunpack.c.h.b16 %v1433
  %v1462 = vunpack.c.l.b16 %v1434
  %v1463 = vunpack.c.h.b16 %v1434
  %v1464 = vunpack.c.l.b16 %v1435
  %v1465 = vunpack.c.h.b16 %v1435
  %v1466 = vunpack.c.l.b16 %v1436
  %v1467 = vunpack.c.h.b16 %v1436
  %v1468 = vunpack.c.l.b16 %v1437
  %v1469 = vunpack.c.h.b16 %v1437
  %v1470 = vunpack.c.l.b16 %v1438
  %v1471 = vunpack.c.h.b16 %v1438
  %v1472 = vunpack.c.l.b16 %v1439
  %v1473 = vunpack.c.h.b16 %v1439
  %v1474 = vunpack.c.l.b16 %v1440
  %v1475 = vunpack.c.h.b16 %v1440
  %v1476 = vunpack.c.l.b16 %v1441
  %v1477 = vunpack.c.h.b16 %v1441
  %v1478 = vpack.c.b16 %v1458, %v1454
  %v1479 = vpack.c.b16 %v1459, %v1455
  %v1480 = vpack.c.b16 %v1460, %v1456
  %v1481 = vpack.c.b16 %v1461, %v1457
  %v1482 = vpack.c.b16 %v1466, %v1462
  %v1483 = vpack.c.b16 %v1467, %v1463
  %v1484 = vpack.c.b16 %v1468, %v1464
  %v1485 = vpack.c.b16 %v1469, %v1465
  %v1486 = vpack.c.b16 %v1474, %v1470
  %v1487 = vpack.c.b16 %v1475, %v1471
  %v1488 = vpack.c.b16 %v1476, %v1472
  %v1489 = vpack.c.b16 %v1477, %v1473
  %1502 = vmatpush.bf16.msra.mxu0 0
  %1503 = vmatpush.bf16.msra.mxu0 0
  %1504 = vmatpush.bf16.msra.mxu0 0
  %1505 = vmatpush.bf16.msra.mxu0 0
  %1506 = vmatpush.bf16.msra.mxu0 0
  %1507 = vmatpush.bf16.msra.mxu0 %v1486
  %1508 = vmatpush.bf16.msra.mxu0 %v1482
  %1509 = vmatpush.bf16.msra.mxu0 %v1478
  %1510 = vmatmul.bf16.gmra.mxu0 %v467
  %v1511 = vpop.f32.mrf.mxu0
  %v1512 = vadd.f32 0.0, %v1511
  %v1513 = vpop.f32.mrf.mxu0
  %v1514 = vadd.f32 0.0, %v1513
  %1515 = vmatmul.bf16.gmra.mxu0 %v470
  %v1516 = vpop.f32.mrf.mxu0
  %v1517 = vadd.f32 0.0, %v1516
  %v1518 = vpop.f32.mrf.mxu0
  %v1519 = vadd.f32 0.0, %v1518
  %1520 = vdwg.mxu0
  %1521 = vmatpush.bf16.msra.mxu0 0
  %1522 = vmatpush.bf16.msra.mxu0 0
  %1523 = vmatpush.bf16.msra.mxu0 0
  %1524 = vmatpush.bf16.msra.mxu0 0
  %1525 = vmatpush.bf16.msra.mxu0 0
  %1526 = vmatpush.bf16.msra.mxu0 %v1487
  %1527 = vmatpush.bf16.msra.mxu0 %v1483
  %1528 = vmatpush.bf16.msra.mxu0 %v1479
  %1529 = vmatmul.bf16.gmra.mxu0 %v467
  %v1530 = vpop.f32.mrf.mxu0
  %v1531 = vadd.f32 0.0, %v1530
  %v1532 = vpop.f32.mrf.mxu0
  %v1533 = vadd.f32 0.0, %v1532
  %1534 = vmatmul.bf16.gmra.mxu0 %v470
  %v1535 = vpop.f32.mrf.mxu0
  %v1536 = vadd.f32 0.0, %v1535
  %v1537 = vpop.f32.mrf.mxu0
  %v1538 = vadd.f32 0.0, %v1537
  %1539 = vdwg.mxu0
  %1540 = vmatpush.bf16.msra.mxu0 0
  %1541 = vmatpush.bf16.msra.mxu0 0
  %1542 = vmatpush.bf16.msra.mxu0 0
  %1543 = vmatpush.bf16.msra.mxu0 0
  %1544 = vmatpush.bf16.msra.mxu0 0
  %1545 = vmatpush.bf16.msra.mxu0 %v1488
  %1546 = vmatpush.bf16.msra.mxu0 %v1484
  %1547 = vmatpush.bf16.msra.mxu0 %v1480
  %1548 = vmatmul.bf16.gmra.mxu0 %v467
  %v1549 = vpop.f32.mrf.mxu0
  %v1550 = vadd.f32 0.0, %v1549
  %v1551 = vpop.f32.mrf.mxu0
  %v1552 = vadd.f32 0.0, %v1551
  %1553 = vmatmul.bf16.gmra.mxu0 %v470
  %v1554 = vpop.f32.mrf.mxu0
  %v1555 = vadd.f32 0.0, %v1554
  %v1556 = vpop.f32.mrf.mxu0
  %v1557 = vadd.f32 0.0, %v1556
  %1558 = vdwg.mxu0
  %1559 = vmatpush.bf16.msra.mxu0 0
  %1560 = vmatpush.bf16.msra.mxu0 0
  %1561 = vmatpush.bf16.msra.mxu0 0
  %1562 = vmatpush.bf16.msra.mxu0 0
  %1563 = vmatpush.bf16.msra.mxu0 0
  %1564 = vmatpush.bf16.msra.mxu0 %v1489
  %1565 = vmatpush.bf16.msra.mxu0 %v1485
  %1566 = vmatpush.bf16.msra.mxu0 %v1481
  %1567 = vmatmul.bf16.gmra.mxu0 %v467
  %v1568 = vpop.f32.mrf.mxu0
  %v1569 = vadd.f32 0.0, %v1568
  %v1570 = vpop.f32.mrf.mxu0
  %v1571 = vadd.f32 0.0, %v1570
  %1572 = vmatmul.bf16.gmra.mxu0 %v470
  %v1573 = vpop.f32.mrf.mxu0
  %v1574 = vadd.f32 0.0, %v1573
  %v1575 = vpop.f32.mrf.mxu0
  %v1576 = vadd.f32 0.0, %v1575
  %1577 = vdwg.mxu0
  %v1578 = vmax.f32 %v1512, 0.0
  %v1579 = vmax.f32 %v1531, 0.0
  %v1580 = vmax.f32 %v1550, 0.0
  %v1581 = vmax.f32 %v1569, 0.0
  %v1582 = vmax.f32 %v1514, 0.0
  %v1583 = vmax.f32 %v1533, 0.0
  %v1584 = vmax.f32 %v1552, 0.0
  %v1585 = vmax.f32 %v1571, 0.0
  %v1586 = vmax.f32 %v1517, 0.0
  %v1587 = vmax.f32 %v1536, 0.0
  %v1588 = vmax.f32 %v1555, 0.0
  %v1589 = vmax.f32 %v1574, 0.0
  %v1590 = vmax.f32 %v1519, 0.0
  %v1591 = vmax.f32 %v1538, 0.0
  %v1592 = vmax.f32 %v1557, 0.0
  %v1593 = vmax.f32 %v1576, 0.0
  %v1594 = vld [vmem:[%s1 + $0x10] sm:$0xf]
  %v1595 = vperm.slane %v1594, 0
  %v1596 = vperm.slane %v1594, 1
  %v1597 = vperm.slane %v1594, 2
  %v1598 = vperm.slane %v1594, 3
  %vm1599 = vcmp.eq.s32.totalorder %v1595, %v382
  %vm1600 = vcmp.eq.s32.totalorder %v1596, %v382
  %vm1601 = vcmp.eq.s32.totalorder %v1597, %v382
  %vm1602 = vcmp.eq.s32.totalorder %v1598, %v382
  %v1603 = vsel %vm1599, 0.00390625, 0.0
  %v1604 = vsel %vm1600, 0.00390625, 0.0
  %v1605 = vsel %vm1601, 0.00390625, 0.0
  %v1606 = vsel %vm1602, 0.00390625, 0.0
  %1607 = vmatpush.xpose.msra.mxu0 0.0
  %1608 = vmatpush.xpose.msra.mxu0 0.0
  %1609 = vmatpush.xpose.msra.mxu0 0.0
  %1610 = vmatpush.xpose.msra.mxu0 0.0
  %1611 = vmatpush.xpose.msra.mxu0 0.0
  %1612 = vmatpush.xpose.msra.mxu0 0.0
  %1613 = vmatpush.xpose.msra.mxu0 0.0
  %1614 = vmatpush.xpose.msra.mxu0 0.0
  %1615 = vmatpush.xpose.msra.mxu0 0.0
  %1616 = vmatpush.xpose.msra.mxu0 0.0
  %1617 = vmatpush.xpose.msra.mxu0 0.0
  %1618 = vmatpush.xpose.msra.mxu0 0.0
  %1619 = vmatpush.xpose.msra.mxu0 %v1590
  %1620 = vmatpush.xpose.msra.mxu0 %v1586
  %1621 = vmatpush.xpose.msra.mxu0 %v1582
  %1622 = vmatpush.xpose.msra.mxu0 %v1578
  %1623 = vmatmul.f32.gmra.mxu0 %v1603
  %v1624 = vpop.f32.mrf.mxu0
  %v1625 = vadd.f32 0.0, %v1624
  %1626 = vdwg.mxu0
  %1627 = vmatpush.xpose.msra.mxu0 0.0
  %1628 = vmatpush.xpose.msra.mxu0 0.0
  %1629 = vmatpush.xpose.msra.mxu0 0.0
  %1630 = vmatpush.xpose.msra.mxu0 0.0
  %1631 = vmatpush.xpose.msra.mxu0 0.0
  %1632 = vmatpush.xpose.msra.mxu0 0.0
  %1633 = vmatpush.xpose.msra.mxu0 0.0
  %1634 = vmatpush.xpose.msra.mxu0 0.0
  %1635 = vmatpush.xpose.msra.mxu0 0.0
  %1636 = vmatpush.xpose.msra.mxu0 0.0
  %1637 = vmatpush.xpose.msra.mxu0 0.0
  %1638 = vmatpush.xpose.msra.mxu0 0.0
  %1639 = vmatpush.xpose.msra.mxu0 %v1591
  %1640 = vmatpush.xpose.msra.mxu0 %v1587
  %1641 = vmatpush.xpose.msra.mxu0 %v1583
  %1642 = vmatpush.xpose.msra.mxu0 %v1579
  %1643 = vmatmul.f32.gmra.mxu0 %v1604
  %v1644 = vpop.f32.mrf.mxu0
  %v1645 = vadd.f32 %v1625, %v1644
  %1646 = vdwg.mxu0
  %1647 = vmatpush.xpose.msra.mxu0 0.0
  %1648 = vmatpush.xpose.msra.mxu0 0.0
  %1649 = vmatpush.xpose.msra.mxu0 0.0
  %1650 = vmatpush.xpose.msra.mxu0 0.0
  %1651 = vmatpush.xpose.msra.mxu0 0.0
  %1652 = vmatpush.xpose.msra.mxu0 0.0
  %1653 = vmatpush.xpose.msra.mxu0 0.0
  %1654 = vmatpush.xpose.msra.mxu0 0.0
  %1655 = vmatpush.xpose.msra.mxu0 0.0
  %1656 = vmatpush.xpose.msra.mxu0 0.0
  %1657 = vmatpush.xpose.msra.mxu0 0.0
  %1658 = vmatpush.xpose.msra.mxu0 0.0
  %1659 = vmatpush.xpose.msra.mxu0 %v1592
  %1660 = vmatpush.xpose.msra.mxu0 %v1588
  %1661 = vmatpush.xpose.msra.mxu0 %v1584
  %1662 = vmatpush.xpose.msra.mxu0 %v1580
  %1663 = vmatmul.f32.gmra.mxu0 %v1605
  %v1664 = vpop.f32.mrf.mxu0
  %v1665 = vadd.f32 %v1645, %v1664
  %1666 = vdwg.mxu0
  %1667 = vmatpush.xpose.msra.mxu0 0.0
  %1668 = vmatpush.xpose.msra.mxu0 0.0
  %1669 = vmatpush.xpose.msra.mxu0 0.0
  %1670 = vmatpush.xpose.msra.mxu0 0.0
  %1671 = vmatpush.xpose.msra.mxu0 0.0
  %1672 = vmatpush.xpose.msra.mxu0 0.0
  %1673 = vmatpush.xpose.msra.mxu0 0.0
  %1674 = vmatpush.xpose.msra.mxu0 0.0
  %1675 = vmatpush.xpose.msra.mxu0 0.0
  %1676 = vmatpush.xpose.msra.mxu0 0.0
  %1677 = vmatpush.xpose.msra.mxu0 0.0
  %1678 = vmatpush.xpose.msra.mxu0 0.0
  %1679 = vmatpush.xpose.msra.mxu0 %v1593
  %1680 = vmatpush.xpose.msra.mxu0 %v1589
  %1681 = vmatpush.xpose.msra.mxu0 %v1585
  %1682 = vmatpush.xpose.msra.mxu0 %v1581
  %1683 = vmatmul.f32.gmra.mxu0 %v1606
  %v1684 = vpop.f32.mrf.mxu0
  %v1685 = vadd.f32 %v1665, %v1684
  %1686 = vdwg.mxu0
  %v1687 = vadd.f32 %v1429, %v1685
  %v1688 = vld [vmem:[%s3] sm:$0xff]
  %v1689 = vld [vmem:[%s3 + $0x8] sm:$0xff]
  %v1690 = vld [vmem:[%s3 + $0x10] sm:$0xff]
  %v1691 = vld [vmem:[%s3 + $0x18] sm:$0xff]
  %v1692 = vld [vmem:[%s3 + $0x20] sm:$0xff]
  %v1693 = vld [vmem:[%s3 + $0x28] sm:$0xff]
  %v1694 = vld [vmem:[%s3 + $0x30] sm:$0xff]
  %v1695 = vld [vmem:[%s3 + $0x38] sm:$0xff]
  %v1696 = vld [vmem:[%s3 + $0x40] sm:$0xff]
  %v1697 = vld [vmem:[%s3 + $0x48] sm:$0xff]
  %v1698 = vld [vmem:[%s3 + $0x50] sm:$0xff]
  %v1699 = vld [vmem:[%s3 + $0x58] sm:$0xff]
  %v1700 = vld [vmem:[%s3 + $0x60] sm:$0xff]
  %vm1701 = vcmask 261120
  %v1703 = vsel %vm1701, %v1687, 0
  %1705 = vmatpush.msra.mxu0 0.0
  %1706 = vmatpush.msra.mxu0 0.0
  %1707 = vmatpush.msra.mxu0 0.0
  %1708 = vmatpush.msra.mxu0 0.0
  %1709 = vmatpush.msra.mxu0 0.0
  %1710 = vmatpush.msra.mxu0 0.0
  %1711 = vmatpush.msra.mxu0 0.0
  %1712 = vmatpush.msra.mxu0 0.0
  %1713 = vmatpush.msra.mxu0 0.0
  %1714 = vmatpush.msra.mxu0 0.0
  %1715 = vmatpush.msra.mxu0 0.0
  %1716 = vmatpush.msra.mxu0 0.0
  %1717 = vmatpush.msra.mxu0 %v1691
  %1718 = vmatpush.msra.mxu0 %v1690
  %1719 = vmatpush.msra.mxu0 %v1689
  %1720 = vmatpush.msra.mxu0 %v1688
  %1721 = vmatmul.f32.gmra.mxu0 %v1703
  %v1722 = vpop.f32.mrf.mxu0
  %v1723 = vadd.f32 0.0, %v1722
  %1724 = vdwg.mxu0
  %v1725 = vsel %vm1701, %v1723, 0.0
  %v1726 = vrot.slane %v1725, 4
  %v1727 = vadd.f32 %v1725, %v1726
  %v1728 = vrot.slane %v1727, 2
  %v1729 = vadd.f32 %v1727, %v1728
  %v1730 = vrot.slane %v1729, 1
  %v1731 = vadd.f32 %v1729, %v1730
  %v1732 = vrcp.pop 8.0
  %v1733 = vmul.f32 8.0, %v1732
  %v1734 = vsub.f32 1.0, %v1733
  %v1735 = vmul.f32 %v1732, %v1734
  %v1736 = vadd.f32 %v1732, %v1735
  %vm1737 = vweird.f32 %v1732
  %v1738 = vsel %vm1737, %v1732, %v1736
  %v1739 = vmul.f32 %v1731, %v1738
  %v1740 = vsub.f32 %v1723, %v1739
  %v1741 = vmul.f32 %v1740, %v1740
  %v1742 = vsel %vm1701, %v1741, 0.0
  %v1743 = vrot.slane %v1742, 4
  %v1744 = vadd.f32 %v1742, %v1743
  %v1745 = vrot.slane %v1744, 2
  %v1746 = vadd.f32 %v1744, %v1745
  %v1747 = vrot.slane %v1746, 1
  %v1748 = vadd.f32 %v1746, %v1747
  %v1749 = vmul.f32 %v1748, %v1738
  %v1750 = vadd.f32 %v1749, 1e-05
  %v1751 = vrsqrt.pop %v1750
  %v1752 = vmul.f32 %v1751, %v1750
  %v1753 = vmul.f32 %v1752, %v1751
  %v1754 = vmul.f32 0.5, %v1753
  %v1755 = vsub.f32 1.5, %v1754
  %v1756 = vmul.f32 %v1751, %v1755
  %vm1757 = vweird.f32 %v1750
  %vm1758 = vweird.f32 %v1751
  %vm1759 = vmor %vm1757, %vm1758
  %v1760 = vsel %vm1759, %v1751, %v1756
  %v1761 = vmul.f32 %v1740, %v1760
  %v1762 = vperm.slane %v1700, 0
  %v1763 = vmul.f32 %v1761, %v1762
  %v1764 = vperm.slane %v1700, 1
  %v1765 = vadd.f32 %v1763, %v1764
  %v1766 = vmax.f32 %v1765, 0.0
  %1771 = vrot.lane.b32.xlu0 %v1688, 96
  %v1772 = vpop.permute.xlu0 %1771
  %1773 = vrot.lane.b32.xlu0 %v1689, 96
  %v1774 = vpop.permute.xlu0 %1773
  %1775 = vrot.lane.b32.xlu0 %v1690, 96
  %v1776 = vpop.permute.xlu0 %1775
  %1777 = vrot.lane.b32.xlu0 %v1691, 96
  %v1778 = vpop.permute.xlu0 %1777
  %v1784 = vsel %vm1701, %v1766, 0
  %1786 = vmatpush.msra.mxu0 0.0
  %1787 = vmatpush.msra.mxu0 0.0
  %1788 = vmatpush.msra.mxu0 0.0
  %1789 = vmatpush.msra.mxu0 0.0
  %1790 = vmatpush.msra.mxu0 0.0
  %1791 = vmatpush.msra.mxu0 0.0
  %1792 = vmatpush.msra.mxu0 0.0
  %1793 = vmatpush.msra.mxu0 0.0
  %1794 = vmatpush.msra.mxu0 0.0
  %1795 = vmatpush.msra.mxu0 0.0
  %1796 = vmatpush.msra.mxu0 0.0
  %1797 = vmatpush.msra.mxu0 0.0
  %1798 = vmatpush.msra.mxu0 %v1778
  %1799 = vmatpush.msra.mxu0 %v1776
  %1800 = vmatpush.msra.mxu0 %v1774
  %1801 = vmatpush.msra.mxu0 %v1772
  %1802 = vmatmul.f32.gmra.mxu0 %v1784
  %v1803 = vpop.f32.mrf.mxu0
  %v1804 = vadd.f32 0.0, %v1803
  %1805 = vdwg.mxu0
  %v1806 = vsel %vm1701, %v1804, 0.0
  %v1807 = vrot.slane %v1806, 4
  %v1808 = vadd.f32 %v1806, %v1807
  %v1809 = vrot.slane %v1808, 2
  %v1810 = vadd.f32 %v1808, %v1809
  %v1811 = vrot.slane %v1810, 1
  %v1812 = vadd.f32 %v1810, %v1811
  %v1813 = vmul.f32 %v1812, %v1738
  %v1814 = vsub.f32 %v1804, %v1813
  %v1815 = vmul.f32 %v1814, %v1814
  %v1816 = vsel %vm1701, %v1815, 0.0
  %v1817 = vrot.slane %v1816, 4
  %v1818 = vadd.f32 %v1816, %v1817
  %v1819 = vrot.slane %v1818, 2
  %v1820 = vadd.f32 %v1818, %v1819
  %v1821 = vrot.slane %v1820, 1
  %v1822 = vadd.f32 %v1820, %v1821
  %v1823 = vmul.f32 %v1822, %v1738
  %v1824 = vadd.f32 %v1823, 1e-05
  %v1825 = vrsqrt.pop %v1824
  %v1826 = vmul.f32 %v1825, %v1824
  %v1827 = vmul.f32 %v1826, %v1825
  %v1828 = vmul.f32 0.5, %v1827
  %v1829 = vsub.f32 1.5, %v1828
  %v1830 = vmul.f32 %v1825, %v1829
  %vm1831 = vweird.f32 %v1824
  %vm1832 = vweird.f32 %v1825
  %vm1833 = vmor %vm1831, %vm1832
  %v1834 = vsel %vm1833, %v1825, %v1830
  %v1835 = vmul.f32 %v1814, %v1834
  %v1836 = vperm.slane %v1700, 2
  %v1837 = vmul.f32 %v1835, %v1836
  %v1838 = vperm.slane %v1700, 3
  %v1839 = vadd.f32 %v1837, %v1838
  %v1840 = vmax.f32 %v1839, 0.0
  %v1841 = vperm.slane %v1700, 4
  %1842 = vrot.lane.b32.xlu0 %v1688, 64
  %v1843 = vpop.permute.xlu0 %1842
  %1844 = vrot.lane.b32.xlu0 %v1689, 64
  %v1845 = vpop.permute.xlu0 %1844
  %1846 = vrot.lane.b32.xlu0 %v1690, 64
  %v1847 = vpop.permute.xlu0 %1846
  %1848 = vrot.lane.b32.xlu0 %v1691, 64
  %v1849 = vpop.permute.xlu0 %1848
  %v1855 = vsel %vm1701, %v1840, 0
  %1857 = vmatpush.msra.mxu0 0.0
  %1858 = vmatpush.msra.mxu0 0.0
  %1859 = vmatpush.msra.mxu0 0.0
  %1860 = vmatpush.msra.mxu0 0.0
  %1861 = vmatpush.msra.mxu0 0.0
  %1862 = vmatpush.msra.mxu0 0.0
  %1863 = vmatpush.msra.mxu0 0.0
  %1864 = vmatpush.msra.mxu0 0.0
  %1865 = vmatpush.msra.mxu0 0.0
  %1866 = vmatpush.msra.mxu0 0.0
  %1867 = vmatpush.msra.mxu0 0.0
  %1868 = vmatpush.msra.mxu0 0.0
  %1869 = vmatpush.msra.mxu0 %v1849
  %1870 = vmatpush.msra.mxu0 %v1847
  %1871 = vmatpush.msra.mxu0 %v1845
  %1872 = vmatpush.msra.mxu0 %v1843
  %1873 = vmatmul.f32.gmra.mxu0 %v1855
  %v1874 = vpop.f32.mrf.mxu0
  %v1875 = vadd.f32 %v1841, %v1874
  %1876 = vdwg.mxu0
  %vm1877 = vcmask 523264
  %v1878 = vsel %vm1877, %v1875, 0.0
  %v1879 = vrot.slane %v1878, 4
  %v1880 = vadd.f32 %v1878, %v1879
  %v1881 = vrot.slane %v1880, 2
  %v1882 = vadd.f32 %v1880, %v1881
  %v1883 = vrot.slane %v1882, 1
  %v1884 = vadd.f32 %v1882, %v1883
  %v1885 = vmul.f32 %v1884, %v1738
  %v1886 = vsub.f32 %v1875, %v1885
  %v1887 = vmul.f32 %v1886, %v1886
  %v1888 = vsel %vm1877, %v1887, 0.0
  %v1889 = vrot.slane %v1888, 4
  %v1890 = vadd.f32 %v1888, %v1889
  %v1891 = vrot.slane %v1890, 2
  %v1892 = vadd.f32 %v1890, %v1891
  %v1893 = vrot.slane %v1892, 1
  %v1894 = vadd.f32 %v1892, %v1893
  %v1895 = vmul.f32 %v1894, %v1738
  %v1896 = vadd.f32 %v1895, 1e-05
  %v1897 = vrsqrt.pop %v1896
  %v1898 = vmul.f32 %v1897, %v1896
  %v1899 = vmul.f32 %v1898, %v1897
  %v1900 = vmul.f32 0.5, %v1899
  %v1901 = vsub.f32 1.5, %v1900
  %v1902 = vmul.f32 %v1897, %v1901
  %vm1903 = vweird.f32 %v1896
  %vm1904 = vweird.f32 %v1897
  %vm1905 = vmor %vm1903, %vm1904
  %v1906 = vsel %vm1905, %v1897, %v1902
  %v1907 = vmul.f32 %v1886, %v1906
  %v1909 = vsel %vm1877, %v1907, 0
  %1911 = vmatpush.msra.mxu0 0.0
  %1912 = vmatpush.msra.mxu0 0.0
  %1913 = vmatpush.msra.mxu0 0.0
  %1914 = vmatpush.msra.mxu0 0.0
  %1915 = vmatpush.msra.mxu0 0.0
  %1916 = vmatpush.msra.mxu0 0.0
  %1917 = vmatpush.msra.mxu0 0.0
  %1918 = vmatpush.msra.mxu0 0.0
  %1919 = vmatpush.msra.mxu0 %v1699
  %1920 = vmatpush.msra.mxu0 %v1698
  %1921 = vmatpush.msra.mxu0 %v1697
  %1922 = vmatpush.msra.mxu0 %v1696
  %1923 = vmatpush.msra.mxu0 %v1695
  %1924 = vmatpush.msra.mxu0 %v1694
  %1925 = vmatpush.msra.mxu0 %v1693
  %1926 = vmatpush.msra.mxu0 %v1692
  %1927 = vmatmul.f32.gmra.mxu0 %v1909
  %v1928 = vpop.f32.mrf.mxu0
  %v1929 = vadd.f32 0.0, %v1928
  %1930 = vdwg.mxu0
  %vm1931 = vcmask 130048
  %v1932 = vsel %vm1931, %v1929, 0.0
  %v1933 = vrot.slane %v1932, 4
  %v1934 = vadd.f32 %v1932, %v1933
  %v1935 = vrot.slane %v1934, 2
  %v1936 = vadd.f32 %v1934, %v1935
  %v1937 = vrot.slane %v1936, 1
  %v1938 = vadd.f32 %v1936, %v1937
  %v1939 = vmul.f32 %v1938, %v1738
  %v1940 = vsub.f32 %v1929, %v1939
  %v1941 = vmul.f32 %v1940, %v1940
  %v1942 = vsel %vm1931, %v1941, 0.0
  %v1943 = vrot.slane %v1942, 4
  %v1944 = vadd.f32 %v1942, %v1943
  %v1945 = vrot.slane %v1944, 2
  %v1946 = vadd.f32 %v1944, %v1945
  %v1947 = vrot.slane %v1946, 1
  %v1948 = vadd.f32 %v1946, %v1947
  %v1949 = vmul.f32 %v1948, %v1738
  %v1950 = vadd.f32 %v1949, 1e-05
  %v1951 = vrsqrt.pop %v1950
  %v1952 = vmul.f32 %v1951, %v1950
  %v1953 = vmul.f32 %v1952, %v1951
  %v1954 = vmul.f32 0.5, %v1953
  %v1955 = vsub.f32 1.5, %v1954
  %v1956 = vmul.f32 %v1951, %v1955
  %vm1957 = vweird.f32 %v1950
  %vm1958 = vweird.f32 %v1951
  %vm1959 = vmor %vm1957, %vm1958
  %v1960 = vsel %vm1959, %v1951, %v1956
  %v1961 = vmul.f32 %v1940, %v1960
  %v1962 = vperm.slane %v1700, 5
  %v1963 = vmul.f32 %v1961, %v1962
  %v1964 = vperm.slane %v1700, 6
  %v1965 = vadd.f32 %v1963, %v1964
  %v1966 = vmax.f32 %v1965, 0.0
  %v1967 = vperm.slane %v1700, 7
  %1976 = vrot.lane.b32.xlu0 %v1692, 112
  %v1977 = vpop.permute.xlu0 %1976
  %1978 = vrot.lane.b32.xlu0 %v1693, 112
  %v1979 = vpop.permute.xlu0 %1978
  %1980 = vrot.lane.b32.xlu0 %v1694, 112
  %v1981 = vpop.permute.xlu0 %1980
  %1982 = vrot.lane.b32.xlu0 %v1695, 112
  %v1983 = vpop.permute.xlu0 %1982
  %1984 = vrot.lane.b32.xlu0 %v1696, 112
  %v1985 = vpop.permute.xlu0 %1984
  %1986 = vrot.lane.b32.xlu0 %v1697, 112
  %v1987 = vpop.permute.xlu0 %1986
  %1988 = vrot.lane.b32.xlu0 %v1698, 112
  %v1989 = vpop.permute.xlu0 %1988
  %1990 = vrot.lane.b32.xlu0 %v1699, 112
  %v1991 = vpop.permute.xlu0 %1990
  %v1993 = vsel %vm1931, %v1966, 0
  %v1995 = vsel %vm1931, %v1977, 0
  %v1997 = vsel %vm1931, %v1979, 0
  %v1999 = vsel %vm1931, %v1981, 0
  %v2001 = vsel %vm1931, %v1983, 0
  %v2003 = vsel %vm1931, %v1985, 0
  %v2005 = vsel %vm1931, %v1987, 0
  %v2007 = vsel %vm1931, %v1989, 0
  %v2009 = vsel %vm1931, %v1991, 0
  %2011 = vmatpush.xpose.msra.mxu0 0.0
  %2012 = vmatpush.xpose.msra.mxu0 0.0
  %2013 = vmatpush.xpose.msra.mxu0 0.0
  %2014 = vmatpush.xpose.msra.mxu0 0.0
  %2015 = vmatpush.xpose.msra.mxu0 0.0
  %2016 = vmatpush.xpose.msra.mxu0 0.0
  %2017 = vmatpush.xpose.msra.mxu0 0.0
  %2018 = vmatpush.xpose.msra.mxu0 0.0
  %2019 = vmatpush.xpose.msra.mxu0 %v2009
  %2020 = vmatpush.xpose.msra.mxu0 %v2007
  %2021 = vmatpush.xpose.msra.mxu0 %v2005
  %2022 = vmatpush.xpose.msra.mxu0 %v2003
  %2023 = vmatpush.xpose.msra.mxu0 %v2001
  %2024 = vmatpush.xpose.msra.mxu0 %v1999
  %2025 = vmatpush.xpose.msra.mxu0 %v1997
  %2026 = vmatpush.xpose.msra.mxu0 %v1995
  %2027 = vmatmul.f32.gmra.mxu0 %v1993
  %v2028 = vpop.f32.mrf.mxu0
  %v2029 = vadd.f32 %v1967, %v2028
  %2030 = vdwg.mxu0
  %2031 = vrot.lane.b32.xlu0 %v1907, 64
  %v2032 = vpop.permute.xlu0 %2031
  %v2034 = vsel %vm1877, %v2029, %v2032
  %2035 = vst [vmem:[%s4] sm:$0xff] %v2034
  // Predicated region
  $region18: #{simsiam_forward.1} parent=0 // pred_check
    _
  $region19: #{simsiam_forward.1} parent=0 // pred_check_branch
    %2037 = sbr.rel (0) target = $region21
  $region20: #{simsiam_forward.1} parent=0 // pred_region
    _
  $region21: #{simsiam_forward.1} parent=0 // pred_fallthru
    _
  // Predicated region
  $region22: #{simsiam_forward.1} parent=0 // pred_check
    _
  $region23: #{simsiam_forward.1} parent=0 // pred_check_branch
    %2039 = sbr.rel (0) target = $region25
  $region24: #{simsiam_forward.1} parent=0 // pred_region
    _
  $region25: #{simsiam_forward.1} parent=0 // pred_fallthru
    _

</llo_original>
